<compile_context>
chip_gen: v6e
topology: v6e:2x2x1
jax: 0.10.0
libtpu: 0.0.40
codegen_flags: <defaults>
</compile_context>

<pallas_src>
import jax
import jax.numpy as jnp
import numpy as np
from jax import lax
from jax.experimental import pallas as pl
from jax.experimental.pallas import tpu as pltpu

# ----------------------------- constants ------------------------------------
N_ATOMS = 129                       # pairwise distances use positions[:, :129]
N_PAIRS = N_ATOMS * (N_ATOMS - 1) // 2          # 8256
N_DIH = 18
N_FEAT = N_DIH + N_PAIRS                        # 8274  (MLP input width)
HID = 100
H_PAD = 128                         # padded hidden / feature-row width
A_BLK = 136                         # 129 atoms padded to a sublane multiple
P_ROWS = 3 * A_BLK                  # 408 rows in the transposed-positions slab
NJ = N_ATOMS - 1                    # 128: j-atoms 0..127 / i-atoms 1..128
MAX_ROW_TILE = 256                  # samples per grid step (lane dimension)

PHI_IDX = [(4, 6, 8, 17), (17, 19, 21, 30), (30, 32, 34, 43), (43, 45, 47, 56),
           (56, 58, 60, 69), (69, 71, 73, 82), (82, 84, 86, 95),
           (95, 97, 99, 108), (108, 110, 112, 121)]
PSI_IDX = [(6, 8, 17, 19), (19, 21, 30, 32), (32, 34, 43, 45), (45, 47, 56, 58),
           (58, 60, 69, 71), (71, 73, 82, 84), (84, 86, 95, 97),
           (97, 99, 108, 110), (110, 112, 121, 123)]


def _round_up(x, m):
    return ((x + m - 1) // m) * m


def _choose_row_tile(n_pad):
    """Lane-aligned sample tile.  For big batches prefer >=2 grid steps so
    v7x's two TensorCores both get work; for small batches use one full-extent
    block (no padded-lane waste)."""
    if n_pad < 2 * H_PAD:
        return n_pad
    half = max(H_PAD, ((n_pad // 2) // H_PAD) * H_PAD)
    return min(MAX_ROW_TILE, half)


# ---------------------- embedding (plain-JAX glue, tiny) ---------------------
def _dihedral(p0, p1, p2, p3):
    """Dihedral angle in degrees. Inputs (n, 3)."""
    b0 = -1.0 * (p1 - p0)
    b1 = p2 - p1
    b2 = p3 - p2
    b1 = b1 / jnp.sqrt(jnp.sum(jnp.square(b1), axis=1, keepdims=True))
    v = b0 - jnp.sum(b0 * b1, axis=1, keepdims=True) * b1
    w = b2 - jnp.sum(b2 * b1, axis=1, keepdims=True) * b1
    x = jnp.sum(v * w, axis=1)
    y = jnp.sum(jnp.cross(b1, v) * w, axis=1)
    return jnp.degrees(jnp.arctan2(y, x))


def compute_aib9_embedding(positions):
    """positions: (n, A, 3) -> (18, n), matching the PyTorch code
    (including its psis[2] := phi2 quirk)."""
    phis = [_dihedral(positions[:, a], positions[:, b],
                      positions[:, c], positions[:, d]) for a, b, c, d in PHI_IDX]
    psis = [_dihedral(positions[:, a], positions[:, b],
                      positions[:, c], positions[:, d]) for a, b, c, d in PSI_IDX]
    psis[2] = phis[2]  # reproduce the original module's use of phi2 in psis
    return jnp.concatenate([jnp.stack(phis), jnp.stack(psis)], axis=0)


def positions_to_pairwise_distances(positions):
    """Reference only: (n, 129, 3) -> (n, 8256) squared distances, strict lower
    triangle in row-major (i, j) order (i > j), like the PyTorch module."""
    diff = positions[:, :, None, :] - positions[:, None, :, :]
    sq = jnp.sum(jnp.square(diff), axis=-1)
    # TODO(synk): torch.nonzero-based tril extraction is replaced by a static
    # tril_indices gather (equivalent for generic off-diagonal positions).
    ti, tj = np.tril_indices(N_ATOMS, -1)
    return sq[:, ti, tj]


# --------------------------- fused Pallas kernel ------------------------------
def _leaky(h):
    return jnp.where(h > 0, h, 0.01 * h)


def fused_kernel(dfeat_ref, pall_ref, w1d_ref, w1e_ref, b1_ref,
                 w2_ref, b2_ref, w3_ref, b3_ref, w4_ref, b4_ref,
                 w5_ref, b5_ref, o_ref, acc_ref):
    """Transposed layout: hidden/features on sublanes, samples on lanes.

    dfeat_ref : (128, T)        bf16   dihedral features (rows 0..17 real)
    pall_ref  : (408, T)        f32    rows c*136+a = coordinate c of atom a
    w1d_ref   : (128, 128)      bf16   W1^T dihedral slice
    w1e_ref   : (128, 128, 128) bf16   [i-1, h, j] = W1[18+pair(i,j), h], 0 if j>=i
    w2..w5    : (128, 128)      f32    transposed, padded
    b1..b5    : (128, 1)        f32
    o_ref     : (128, T)        f32    row 0 holds the prediction
    acc_ref   : (128, T)        f32    layer-1 accumulator scratch
    """
    # Layer-1 contribution of the 18 dihedral features (also inits acc).
    acc_ref[...] = jnp.dot(w1d_ref[...], dfeat_ref[...],
                           preferred_element_type=jnp.float32)

    def body(r, carry):
        i = r + 1                                      # atom i = 1..128
        # per-sample coordinates of atom i -> (1, T)  (dynamic sublane slice)
        xi = pall_ref[pl.ds(i, 1), :]
        yi = pall_ref[pl.ds(A_BLK + i, 1), :]
        zi = pall_ref[pl.ds(2 * A_BLK + i, 1), :]
        # coordinates of atoms j = 0..127 -> (128, T)  (static slices)
        dx = xi - pall_ref[0:NJ, :]
        dy = yi - pall_ref[A_BLK:A_BLK + NJ, :]
        dz = zi - pall_ref[2 * A_BLK:2 * A_BLK + NJ, :]
        d2 = dx * dx + dy * dy + dz * dz
        # Diagonal (j == i) is exactly 0 and its W1 weight is 0: clamp so the
        # reciprocal stays finite (inf * 0 would give NaN in the MXU sum).
        d2 = jnp.maximum(d2, 1e-20)
        row = pl.reciprocal(d2, approx=True).astype(jnp.bfloat16)   # (128, T)
        acc_ref[...] += jnp.dot(w1e_ref[r], row,
                                preferred_element_type=jnp.float32)
        return carry

    lax.fori_loop(0, NJ, body, 0)

    h = _leaky(acc_ref[...] + b1_ref[...])
    h = _leaky(jnp.dot(w2_ref[...], h, preferred_element_type=jnp.float32) + b2_ref[...])
    h = _leaky(jnp.dot(w3_ref[...], h, preferred_element_type=jnp.float32) + b3_ref[...])
    h = _leaky(jnp.dot(w4_ref[...], h, preferred_element_type=jnp.float32) + b4_ref[...])
    o_ref[...] = jnp.dot(w5_ref[...], h, preferred_element_type=jnp.float32) + b5_ref[...]


def run_mlp_pallas(dfeat_t, pall, packed, row_tile):
    """dfeat_t: (128, n_pad) bf16, pall: (408, n_pad) f32.  Returns (128, n_pad) f32."""
    n_pad = dfeat_t.shape[1]
    grid = (pl.cdiv(n_pad, row_tile),)

    # Invariant weights/biases: whole-array VMEM residency (DMA'd once).
    resident = pl.BlockSpec(memory_space=pltpu.MemorySpace.VMEM)

    def col_spec(rows):
        return pl.BlockSpec((rows, row_tile), lambda i: (0, i))

    return pl.pallas_call(
        fused_kernel,
        out_shape=jax.ShapeDtypeStruct((H_PAD, n_pad), jnp.float32),
        grid=grid,
        in_specs=[
            col_spec(H_PAD),       # dfeat_t
            col_spec(P_ROWS),      # pall
            resident, resident, resident,          # w1d, w1e, b1
            resident, resident,                    # w2, b2
            resident, resident,                    # w3, b3
            resident, resident,                    # w4, b4
            resident, resident,                    # w5, b5
        ],
        out_specs=col_spec(H_PAD),
        scratch_shapes=[pltpu.VMEM((H_PAD, row_tile), jnp.float32)],
        compiler_params=pltpu.CompilerParams(
            dimension_semantics=("parallel",),
            vmem_limit_bytes=32 * 1024 * 1024),
    )(dfeat_t, pall,
      packed["w1d"], packed["w1e"], packed["b1"],
      packed["w2"], packed["b2"], packed["w3"], packed["b3"],
      packed["w4"], packed["b4"], packed["w5"], packed["b5"])


# ------------------------------ forward --------------------------------------
@jax.jit
def predict_net_forward(positions, velos, packed):
    # velos is unused, matching the PyTorch forward.
    del velos
    n = positions.shape[0]
    n_pad = _round_up(n, 8)
    row_tile = _choose_row_tile(n_pad)

    pos129 = positions[:, :N_ATOMS, :]

    # 18 dihedral features, already (feature, sample) i.e. transposed. Tiny.
    emb = compute_aib9_embedding(positions)                         # (18, n) f32
    dfeat_t = jnp.pad(emb, ((0, H_PAD - N_DIH), (0, n_pad - n))).astype(jnp.bfloat16)

    # Transposed positions slab: rows c*A_BLK + a hold coordinate c of atom a.
    pos_t = jnp.transpose(pos129, (2, 1, 0))                        # (3, 129, n)
    pos_t = jnp.pad(pos_t, ((0, 0), (0, A_BLK - N_ATOMS), (0, n_pad - n)))
    pall = pos_t.reshape(P_ROWS, n_pad).astype(jnp.float32)         # (408, n_pad)

    out_t = run_mlp_pallas(dfeat_t, pall, packed, row_tile)         # (128, n_pad)
    return out_t[0, :n].reshape(n, 1)                               # (n, 1)


# --------------------------- parameter packing --------------------------------
def pack_params(params):
    """Pad / transpose / bf16-cast the weights once (outside the per-call jit).
    The lower-triangle pair ordering of the PyTorch nonzero-gather is baked
    statically into the expanded layer-1 weight w1e."""
    np_params = [(np.asarray(w, np.float32), np.asarray(b, np.float32))
                 for (w, b) in params]
    (w1, b1), (w2, b2), (w3, b3), (w4, b4), (w5, b5) = np_params

    # Layer-1 dihedral slice, transposed + padded: (h_out, feature).
    w1d = np.zeros((H_PAD, H_PAD), np.float32)
    w1d[:HID, :N_DIH] = w1[:N_DIH, :].T

    # Layer-1 distance slice expanded to [i-1, h_out, j]; zero where j >= i so
    # the in-kernel full 128-wide rows (diagonal / upper triangle) contribute 0.
    w1e = np.zeros((NJ, H_PAD, NJ), np.float32)
    ti, tj = np.tril_indices(N_ATOMS, -1)      # pair p -> (i=ti[p] > j=tj[p]), row-major
    w1e[ti - 1, :HID, tj] = w1[N_DIH:, :]

    def tr(w):
        out = np.zeros((H_PAD, H_PAD), np.float32)
        out[:w.shape[1], :w.shape[0]] = w.T
        return jnp.asarray(out)

    def bias(b):
        out = np.zeros((H_PAD, 1), np.float32)
        out[:b.shape[0], 0] = b
        return jnp.asarray(out)

    return dict(
        w1d=jnp.asarray(w1d, jnp.bfloat16),
        w1e=jnp.asarray(w1e, jnp.bfloat16),
        b1=bias(b1),
        w2=tr(w2), b2=bias(b2),
        w3=tr(w3), b3=bias(b3),
        w4=tr(w4), b4=bias(b4),
        w5=tr(w5), b5=bias(b5),
    )


# --------------------------- parameter init -----------------------------------
def init_linear(key, fan_in, fan_out):
    kw, kb = jax.random.split(key)
    bound = 1.0 / float(np.sqrt(fan_in))
    w = jax.random.uniform(kw, (fan_in, fan_out), jnp.float32, -bound, bound)
    b = jax.random.uniform(kb, (fan_out,), jnp.float32, -bound, bound)
    return w, b


def init_params(key):
    keys = jax.random.split(key, 5)
    return (
        init_linear(keys[0], N_FEAT, HID),
        init_linear(keys[1], HID, HID),
        init_linear(keys[2], HID, HID),
        init_linear(keys[3], HID, HID),
        init_linear(keys[4], HID, 1),
    )


# ------------------------------- reference ------------------------------------
def mlp_reference(d3, params):
    h = d3
    for i, (w, b) in enumerate(params):
        h = h @ w + b
        if i < len(params) - 1:
            h = jnp.where(h > 0, h, 0.01 * h)
    return h


if __name__ == "__main__":
    key = jax.random.PRNGKey(0)
    kp, kv, kparam = jax.random.split(key, 3)
    params = init_params(kparam)
    packed = pack_params(params)       # pad / transpose / cast once

    # batch=2 exercises the tiny full-extent block; batch=260 exercises the
    # multi-step cdiv grid with a partial last block.
    for batch in (2, 260):
        kpb, kvb = jax.random.split(jax.random.fold_in(kp, batch))
        positions = jax.random.normal(kpb, (batch, N_ATOMS, 3), jnp.float32) * 2.0
        velos = jax.random.normal(kvb, (batch, N_ATOMS, 3), jnp.float32)

        pred = predict_net_forward(positions, velos, packed)
        pred = jax.block_until_ready(pred)
        assert pred.shape == (batch, 1), pred.shape

        # sanity check against a pure-JAX fp32 reference of the full forward
        D = compute_aib9_embedding(positions).T
        D2 = positions_to_pairwise_distances(positions[:, :N_ATOMS])
        D3 = jnp.concatenate([D, 1.0 / D2], axis=-1)
        ref = mlp_reference(D3, params)
        np.testing.assert_allclose(np.asarray(pred), np.asarray(ref),
                                   rtol=5e-2, atol=5e-2)

    print("KERNEL_OK")
</pallas_src>

<mosaic_0001>
module attributes {stable_mosaic.version = 11 : i64} {
  func.func @fused_kernel(%arg0: i32, %arg1: memref<128x8xbf16, #tpu.memory_space<vmem>>, %arg2: memref<408x8xf32, #tpu.memory_space<vmem>>, %arg3: memref<128x128xbf16, #tpu.memory_space<vmem>>, %arg4: memref<128x128x128xbf16, #tpu.memory_space<vmem>>, %arg5: memref<128x1xf32, #tpu.memory_space<vmem>>, %arg6: memref<128x128xf32, #tpu.memory_space<vmem>>, %arg7: memref<128x1xf32, #tpu.memory_space<vmem>>, %arg8: memref<128x128xf32, #tpu.memory_space<vmem>>, %arg9: memref<128x1xf32, #tpu.memory_space<vmem>>, %arg10: memref<128x128xf32, #tpu.memory_space<vmem>>, %arg11: memref<128x1xf32, #tpu.memory_space<vmem>>, %arg12: memref<128x128xf32, #tpu.memory_space<vmem>>, %arg13: memref<128x1xf32, #tpu.memory_space<vmem>>, %arg14: memref<128x8xf32, #tpu.memory_space<vmem>>, %arg15: memref<128x8xf32, #tpu.memory_space<vmem>>) attributes {dimension_semantics = [#tpu.dimension_semantics<parallel>], iteration_bounds = array<i64: 1>, scalar_prefetch = 0 : i64, scratch_operands = 1 : i64, tpu.core_type = #tpu.core_type<tc>, window_params = [{transform_indices = @transform_0, window_bounds = array<i64: 128, 8>}, {transform_indices = @transform_1, window_bounds = array<i64: 408, 8>}, {pipeline_mode = #tpu.pipeline_mode<synchronous>, transform_indices = @transform_2, window_bounds = array<i64: 128, 128>}, {pipeline_mode = #tpu.pipeline_mode<synchronous>, transform_indices = @transform_3, window_bounds = array<i64: 128, 128, 128>}, {pipeline_mode = #tpu.pipeline_mode<synchronous>, transform_indices = @transform_4, window_bounds = array<i64: 128, 1>}, {pipeline_mode = #tpu.pipeline_mode<synchronous>, transform_indices = @transform_5, window_bounds = array<i64: 128, 128>}, {pipeline_mode = #tpu.pipeline_mode<synchronous>, transform_indices = @transform_6, window_bounds = array<i64: 128, 1>}, {pipeline_mode = #tpu.pipeline_mode<synchronous>, transform_indices = @transform_7, window_bounds = array<i64: 128, 128>}, {pipeline_mode = #tpu.pipeline_mode<synchronous>, transform_indices = @transform_8, window_bounds = array<i64: 128, 1>}, {pipeline_mode = #tpu.pipeline_mode<synchronous>, transform_indices = @transform_9, window_bounds = array<i64: 128, 128>}, {pipeline_mode = #tpu.pipeline_mode<synchronous>, transform_indices = @transform_10, window_bounds = array<i64: 128, 1>}, {pipeline_mode = #tpu.pipeline_mode<synchronous>, transform_indices = @transform_11, window_bounds = array<i64: 128, 128>}, {pipeline_mode = #tpu.pipeline_mode<synchronous>, transform_indices = @transform_12, window_bounds = array<i64: 128, 1>}, {transform_indices = @transform_13, window_bounds = array<i64: 128, 8>}]} {
    %c0 = arith.constant 0 : index
    %c0_0 = arith.constant 0 : index
    %0 = vector.load %arg3[%c0, %c0_0] : memref<128x128xbf16, #tpu.memory_space<vmem>>, vector<128x128xbf16>
    %c0_1 = arith.constant 0 : index
    %c0_2 = arith.constant 0 : index
    %1 = vector.load %arg1[%c0_1, %c0_2] : memref<128x8xbf16, #tpu.memory_space<vmem>>, vector<128x8xbf16>
    %cst = arith.constant dense<0.000000e+00> : vector<128x8xf32>
    %2 = tpu.matmul %0, %1, %cst {dimension_numbers = #tpu.dot_dimension_numbers<[1], [0], [0], [1], [0, 0, 1, 1], [], []>} : vector<128x128xbf16>, vector<128x8xbf16>, vector<128x8xf32> -> vector<128x8xf32>
    %c0_3 = arith.constant 0 : index
    %c0_4 = arith.constant 0 : index
    %3 = vector.load %arg15[%c0_3, %c0_4] : memref<128x8xf32, #tpu.memory_space<vmem>>, vector<128x8xf32>
    tpu.vector_store %arg15[%c0_3, %c0_4], %2 {strides = array<i32>} : memref<128x8xf32, #tpu.memory_space<vmem>>, vector<128x8xf32>,
    %c0_i32 = arith.constant 0 : i32
    %c128_i32 = arith.constant 128 : i32
    %4 = arith.addi %c0_i32, %c128_i32 : i32
    %c1_i32 = arith.constant 1 : i32
    scf.for %arg16 = %c0_i32 to %4 step %c1_i32  : i32 {
      %c1_i32_40 = arith.constant 1 : i32
      %50 = arith.addi %arg16, %c1_i32_40 : i32
      %51 = arith.index_cast %50 : i32 to index
      %c0_41 = arith.constant 0 : index
      %52 = vector.load %arg2[%51, %c0_41] : memref<408x8xf32, #tpu.memory_space<vmem>>, vector<1x8xf32>
      %c136_i32 = arith.constant 136 : i32
      %53 = arith.addi %c136_i32, %50 : i32
      %54 = arith.index_cast %53 : i32 to index
      %c0_42 = arith.constant 0 : index
      %55 = vector.load %arg2[%54, %c0_42] : memref<408x8xf32, #tpu.memory_space<vmem>>, vector<1x8xf32>
      %c272_i32 = arith.constant 272 : i32
      %56 = arith.addi %c272_i32, %50 : i32
      %57 = arith.index_cast %56 : i32 to index
      %c0_43 = arith.constant 0 : index
      %58 = vector.load %arg2[%57, %c0_43] : memref<408x8xf32, #tpu.memory_space<vmem>>, vector<1x8xf32>
      %c0_44 = arith.constant 0 : index
      %c0_45 = arith.constant 0 : index
      %59 = vector.load %arg2[%c0_44, %c0_45] : memref<408x8xf32, #tpu.memory_space<vmem>>, vector<128x8xf32>
      %60 = vector.broadcast %52 : vector<1x8xf32> to vector<128x8xf32>
      %61 = arith.subf %60, %59 : vector<128x8xf32>
      %c136 = arith.constant 136 : index
      %c0_46 = arith.constant 0 : index
      %62 = vector.load %arg2[%c136, %c0_46] : memref<408x8xf32, #tpu.memory_space<vmem>>, vector<128x8xf32>
      %63 = vector.broadcast %55 : vector<1x8xf32> to vector<128x8xf32>
      %64 = arith.subf %63, %62 : vector<128x8xf32>
      %c272 = arith.constant 272 : index
      %c0_47 = arith.constant 0 : index
      %65 = vector.load %arg2[%c272, %c0_47] : memref<408x8xf32, #tpu.memory_space<vmem>>, vector<128x8xf32>
      %66 = vector.broadcast %58 : vector<1x8xf32> to vector<128x8xf32>
      %67 = arith.subf %66, %65 : vector<128x8xf32>
      %68 = arith.mulf %61, %61 : vector<128x8xf32>
      %69 = arith.mulf %64, %64 : vector<128x8xf32>
      %70 = arith.addf %68, %69 : vector<128x8xf32>
      %71 = arith.mulf %67, %67 : vector<128x8xf32>
      %72 = arith.addf %70, %71 : vector<128x8xf32>
      %cst_48 = arith.constant 9.99999968E-21 : f32
      %73 = vector.broadcast %cst_48 : f32 to vector<128x8xf32>
      %74 = arith.maximumf %72, %73 : vector<128x8xf32>
      %75 = tpu.reciprocal %74 {approx = true} : vector<128x8xf32> -> vector<128x8xf32>
      %76 = arith.truncf %75 : vector<128x8xf32> to vector<128x8xbf16>
      %c0_49 = arith.constant 0 : index
      %c0_50 = arith.constant 0 : index
      %77 = vector.load %arg15[%c0_49, %c0_50] : memref<128x8xf32, #tpu.memory_space<vmem>>, vector<128x8xf32>
      %78 = arith.index_cast %arg16 : i32 to index
      %c0_51 = arith.constant 0 : index
      %c0_52 = arith.constant 0 : index
      %79 = vector.load %arg4[%78, %c0_51, %c0_52] : memref<128x128x128xbf16, #tpu.memory_space<vmem>>, vector<1x128x128xbf16>
      %80 = vector.shape_cast %79 : vector<1x128x128xbf16> to vector<128x128xbf16>
      %cst_53 = arith.constant dense<0.000000e+00> : vector<128x8xf32>
      %81 = tpu.matmul %80, %76, %cst_53 {dimension_numbers = #tpu.dot_dimension_numbers<[1], [0], [0], [1], [0, 0, 1, 1], [], []>} : vector<128x128xbf16>, vector<128x8xbf16>, vector<128x8xf32> -> vector<128x8xf32>
      %82 = arith.addf %77, %81 : vector<128x8xf32>
      %c0_54 = arith.constant 0 : index
      %c0_55 = arith.constant 0 : index
      %83 = vector.load %arg15[%c0_54, %c0_55] : memref<128x8xf32, #tpu.memory_space<vmem>>, vector<128x8xf32>
      tpu.vector_store %arg15[%c0_54, %c0_55], %82 {strides = array<i32>} : memref<128x8xf32, #tpu.memory_space<vmem>>, vector<128x8xf32>,
    }
    %c128_i32_5 = arith.constant 128 : i32
    %c0_6 = arith.constant 0 : index
    %c0_7 = arith.constant 0 : index
    %5 = vector.load %arg15[%c0_6, %c0_7] : memref<128x8xf32, #tpu.memory_space<vmem>>, vector<128x8xf32>
    %c0_8 = arith.constant 0 : index
    %c0_9 = arith.constant 0 : index
    %6 = vector.load %arg5[%c0_8, %c0_9] : memref<128x1xf32, #tpu.memory_space<vmem>>, vector<128x1xf32>
    %7 = vector.broadcast %6 : vector<128x1xf32> to vector<128x8xf32>
    %8 = arith.addf %5, %7 : vector<128x8xf32>
    %cst_10 = arith.constant 0.000000e+00 : f32
    %9 = vector.broadcast %cst_10 : f32 to vector<128x8xf32>
    %10 = arith.cmpf ogt, %8, %9 : vector<128x8xf32>
    %cst_11 = arith.constant 0.00999999977 : f32
    %11 = vector.broadcast %cst_11 : f32 to vector<128x8xf32>
    %12 = arith.mulf %11, %8 : vector<128x8xf32>
    %13 = arith.select %10, %8, %12 : vector<128x8xi1>, vector<128x8xf32>
    %c0_12 = arith.constant 0 : index
    %c0_13 = arith.constant 0 : index
    %14 = vector.load %arg6[%c0_12, %c0_13] : memref<128x128xf32, #tpu.memory_space<vmem>>, vector<128x128xf32>
    %cst_14 = arith.constant dense<0.000000e+00> : vector<128x8xf32>
    %15 = tpu.matmul %14, %13, %cst_14 {dimension_numbers = #tpu.dot_dimension_numbers<[1], [0], [0], [1], [0, 0, 1, 1], [], []>} : vector<128x128xf32>, vector<128x8xf32>, vector<128x8xf32> -> vector<128x8xf32>
    %c0_15 = arith.constant 0 : index
    %c0_16 = arith.constant 0 : index
    %16 = vector.load %arg7[%c0_15, %c0_16] : memref<128x1xf32, #tpu.memory_space<vmem>>, vector<128x1xf32>
    %17 = vector.broadcast %16 : vector<128x1xf32> to vector<128x8xf32>
    %18 = arith.addf %15, %17 : vector<128x8xf32>
    %cst_17 = arith.constant 0.000000e+00 : f32
    %19 = vector.broadcast %cst_17 : f32 to vector<128x8xf32>
    %20 = arith.cmpf ogt, %18, %19 : vector<128x8xf32>
    %cst_18 = arith.constant 0.00999999977 : f32
    %21 = vector.broadcast %cst_18 : f32 to vector<128x8xf32>
    %22 = arith.mulf %21, %18 : vector<128x8xf32>
    %23 = arith.select %20, %18, %22 : vector<128x8xi1>, vector<128x8xf32>
    %c0_19 = arith.constant 0 : index
    %c0_20 = arith.constant 0 : index
    %24 = vector.load %arg8[%c0_19, %c0_20] : memref<128x128xf32, #tpu.memory_space<vmem>>, vector<128x128xf32>
    %cst_21 = arith.constant dense<0.000000e+00> : vector<128x8xf32>
    %25 = tpu.matmul %24, %23, %cst_21 {dimension_numbers = #tpu.dot_dimension_numbers<[1], [0], [0], [1], [0, 0, 1, 1], [], []>} : vector<128x128xf32>, vector<128x8xf32>, vector<128x8xf32> -> vector<128x8xf32>
    %c0_22 = arith.constant 0 : index
    %c0_23 = arith.constant 0 : index
    %26 = vector.load %arg9[%c0_22, %c0_23] : memref<128x1xf32, #tpu.memory_space<vmem>>, vector<128x1xf32>
    %27 = vector.broadcast %26 : vector<128x1xf32> to vector<128x8xf32>
    %28 = arith.addf %25, %27 : vector<128x8xf32>
    %cst_24 = arith.constant 0.000000e+00 : f32
    %29 = vector.broadcast %cst_24 : f32 to vector<128x8xf32>
    %30 = arith.cmpf ogt, %28, %29 : vector<128x8xf32>
    %cst_25 = arith.constant 0.00999999977 : f32
    %31 = vector.broadcast %cst_25 : f32 to vector<128x8xf32>
    %32 = arith.mulf %31, %28 : vector<128x8xf32>
    %33 = arith.select %30, %28, %32 : vector<128x8xi1>, vector<128x8xf32>
    %c0_26 = arith.constant 0 : index
    %c0_27 = arith.constant 0 : index
    %34 = vector.load %arg10[%c0_26, %c0_27] : memref<128x128xf32, #tpu.memory_space<vmem>>, vector<128x128xf32>
    %cst_28 = arith.constant dense<0.000000e+00> : vector<128x8xf32>
    %35 = tpu.matmul %34, %33, %cst_28 {dimension_numbers = #tpu.dot_dimension_numbers<[1], [0], [0], [1], [0, 0, 1, 1], [], []>} : vector<128x128xf32>, vector<128x8xf32>, vector<128x8xf32> -> vector<128x8xf32>
    %c0_29 = arith.constant 0 : index
    %c0_30 = arith.constant 0 : index
    %36 = vector.load %arg11[%c0_29, %c0_30] : memref<128x1xf32, #tpu.memory_space<vmem>>, vector<128x1xf32>
    %37 = vector.broadcast %36 : vector<128x1xf32> to vector<128x8xf32>
    %38 = arith.addf %35, %37 : vector<128x8xf32>
    %cst_31 = arith.constant 0.000000e+00 : f32
    %39 = vector.broadcast %cst_31 : f32 to vector<128x8xf32>
    %40 = arith.cmpf ogt, %38, %39 : vector<128x8xf32>
    %cst_32 = arith.constant 0.00999999977 : f32
    %41 = vector.broadcast %cst_32 : f32 to vector<128x8xf32>
    %42 = arith.mulf %41, %38 : vector<128x8xf32>
    %43 = arith.select %40, %38, %42 : vector<128x8xi1>, vector<128x8xf32>
    %c0_33 = arith.constant 0 : index
    %c0_34 = arith.constant 0 : index
    %44 = vector.load %arg12[%c0_33, %c0_34] : memref<128x128xf32, #tpu.memory_space<vmem>>, vector<128x128xf32>
    %cst_35 = arith.constant dense<0.000000e+00> : vector<128x8xf32>
    %45 = tpu.matmul %44, %43, %cst_35 {dimension_numbers = #tpu.dot_dimension_numbers<[1], [0], [0], [1], [0, 0, 1, 1], [], []>} : vector<128x128xf32>, vector<128x8xf32>, vector<128x8xf32> -> vector<128x8xf32>
    %c0_36 = arith.constant 0 : index
    %c0_37 = arith.constant 0 : index
    %46 = vector.load %arg13[%c0_36, %c0_37] : memref<128x1xf32, #tpu.memory_space<vmem>>, vector<128x1xf32>
    %47 = vector.broadcast %46 : vector<128x1xf32> to vector<128x8xf32>
    %48 = arith.addf %45, %47 : vector<128x8xf32>
    %c0_38 = arith.constant 0 : index
    %c0_39 = arith.constant 0 : index
    %49 = vector.load %arg14[%c0_38, %c0_39] : memref<128x8xf32, #tpu.memory_space<vmem>>, vector<128x8xf32>
    tpu.vector_store %arg14[%c0_38, %c0_39], %48 {strides = array<i32>} : memref<128x8xf32, #tpu.memory_space<vmem>>, vector<128x8xf32>,
    return
  }
  func.func @transform_0(%arg0: i32) -> (i32, i32) {
    %c0_i32 = arith.constant 0 : i32
    %c0_i32_0 = arith.constant 0 : i32
    return %c0_i32, %arg0 : i32, i32
  }
  func.func @transform_1(%arg0: i32) -> (i32, i32) {
    %c0_i32 = arith.constant 0 : i32
    %c0_i32_0 = arith.constant 0 : i32
    return %c0_i32, %arg0 : i32, i32
  }
  func.func @transform_2(%arg0: i32) -> (i32, i32) {
    %c0_i32 = arith.constant 0 : i32
    %c0_i32_0 = arith.constant 0 : i32
    %c0_i32_1 = arith.constant 0 : i32
    return %c0_i32, %c0_i32_0 : i32, i32
  }
  func.func @transform_3(%arg0: i32) -> (i32, i32, i32) {
    %c0_i32 = arith.constant 0 : i32
    %c0_i32_0 = arith.constant 0 : i32
    %c0_i32_1 = arith.constant 0 : i32
    %c0_i32_2 = arith.constant 0 : i32
    return %c0_i32, %c0_i32_0, %c0_i32_1 : i32, i32, i32
  }
  func.func @transform_4(%arg0: i32) -> (i32, i32) {
    %c0_i32 = arith.constant 0 : i32
    %c0_i32_0 = arith.constant 0 : i32
    %c0_i32_1 = arith.constant 0 : i32
    return %c0_i32, %c0_i32_0 : i32, i32
  }
  func.func @transform_5(%arg0: i32) -> (i32, i32) {
    %c0_i32 = arith.constant 0 : i32
    %c0_i32_0 = arith.constant 0 : i32
    %c0_i32_1 = arith.constant 0 : i32
    return %c0_i32, %c0_i32_0 : i32, i32
  }
  func.func @transform_6(%arg0: i32) -> (i32, i32) {
    %c0_i32 = arith.constant 0 : i32
    %c0_i32_0 = arith.constant 0 : i32
    %c0_i32_1 = arith.constant 0 : i32
    return %c0_i32, %c0_i32_0 : i32, i32
  }
  func.func @transform_7(%arg0: i32) -> (i32, i32) {
    %c0_i32 = arith.constant 0 : i32
    %c0_i32_0 = arith.constant 0 : i32
    %c0_i32_1 = arith.constant 0 : i32
    return %c0_i32, %c0_i32_0 : i32, i32
  }
  func.func @transform_8(%arg0: i32) -> (i32, i32) {
    %c0_i32 = arith.constant 0 : i32
    %c0_i32_0 = arith.constant 0 : i32
    %c0_i32_1 = arith.constant 0 : i32
    return %c0_i32, %c0_i32_0 : i32, i32
  }
  func.func @transform_9(%arg0: i32) -> (i32, i32) {
    %c0_i32 = arith.constant 0 : i32
    %c0_i32_0 = arith.constant 0 : i32
    %c0_i32_1 = arith.constant 0 : i32
    return %c0_i32, %c0_i32_0 : i32, i32
  }
  func.func @transform_10(%arg0: i32) -> (i32, i32) {
    %c0_i32 = arith.constant 0 : i32
    %c0_i32_0 = arith.constant 0 : i32
    %c0_i32_1 = arith.constant 0 : i32
    return %c0_i32, %c0_i32_0 : i32, i32
  }
  func.func @transform_11(%arg0: i32) -> (i32, i32) {
    %c0_i32 = arith.constant 0 : i32
    %c0_i32_0 = arith.constant 0 : i32
    %c0_i32_1 = arith.constant 0 : i32
    return %c0_i32, %c0_i32_0 : i32, i32
  }
  func.func @transform_12(%arg0: i32) -> (i32, i32) {
    %c0_i32 = arith.constant 0 : i32
    %c0_i32_0 = arith.constant 0 : i32
    %c0_i32_1 = arith.constant 0 : i32
    return %c0_i32, %c0_i32_0 : i32, i32
  }
  func.func @transform_13(%arg0: i32) -> (i32, i32) {
    %c0_i32 = arith.constant 0 : i32
    %c0_i32_0 = arith.constant 0 : i32
    return %c0_i32, %arg0 : i32, i32
  }
}

</mosaic_0001>

<llo_original>
// kernel: predict_net_forward.1
$region0: #{predict_net_forward.1}
  #allocation0 [shape = 'u32[]', space=smem, size = 0x4, offset = 0x4, fixed_abs, tag = 'smem constant byte address 0x4 - core index']
  #allocation1 [shape = 'u32[144,128]{1,0:T(1,128)}', space=vmem, size = 0x12000, scoped, tag = 'internal scratch']
  #allocation2 [shape = 'f32[128,8]{1,0:T(8,128)}', space=vmem, size = 0x10000, scoped, tag = 'scratch operand']
  %s0 = inlined_call_operand.vmem [shape: bf16[128,8], index: 0, kind: input, shape index: {}]
  %s1 = inlined_call_operand.vmem [shape: f32[408,8], index: 1, kind: input, shape index: {}]
  %s2 = inlined_call_operand.hbm [shape: bf16[128,128], index: 2, kind: input, shape index: {}]
  %s3 = inlined_call_operand.hbm [shape: bf16[128,128,128], index: 3, kind: input, shape index: {}]
  %s4 = inlined_call_operand.vmem [shape: f32[128,1], index: 4, kind: input, shape index: {}]
  %s5 = inlined_call_operand.hbm [shape: f32[128,128], index: 5, kind: input, shape index: {}]
  %s6 = inlined_call_operand.vmem [shape: f32[128,1], index: 6, kind: input, shape index: {}]
  %s7 = inlined_call_operand.hbm [shape: f32[128,128], index: 7, kind: input, shape index: {}]
  %s8 = inlined_call_operand.vmem [shape: f32[128,1], index: 8, kind: input, shape index: {}]
  %s9 = inlined_call_operand.hbm [shape: f32[128,128], index: 9, kind: input, shape index: {}]
  %s10 = inlined_call_operand.vmem [shape: f32[128,1], index: 10, kind: input, shape index: {}]
  %s11 = inlined_call_operand.hbm [shape: f32[128,128], index: 11, kind: input, shape index: {}]
  %s12 = inlined_call_operand.vmem [shape: f32[128,1], index: 12, kind: input, shape index: {}]
  %s13 = inlined_call_operand.vmem [shape: f32[128,8], index: 13, kind: output, shape index: {}]
  %s14 = sld [smem:[#allocation0]]
  $region93: #{predict_net_forward.1} parent=0
    _
  %s16 = ssub.s32 1, %s14
  %s17 = scalar_select 0, %s16, %s14
  $region1: #{predict_net_forward.1} parent=0
    #allocation3 [shape = 'u8[32768]{0}', space=vmem, size = 0x8000, scoped, tag = 'input window, operand 2, single buffered']
    #allocation4 [shape = 's32[1]{0}', space=sflag, size = 0x4, scoped, tag = 'scoped memory for predict_net_forward.1']
    #allocation5 [shape = 'u8[4194304]{0}', space=vmem, size = 0x400000, scoped, tag = 'input window, operand 3, single buffered']
    #allocation6 [shape = 's32[1]{0}', space=sflag, size = 0x4, scoped, tag = 'scoped memory for predict_net_forward.1']
    #allocation7 [shape = 'u8[65536]{0}', space=vmem, size = 0x10000, scoped, tag = 'input window, operand 5, single buffered']
    #allocation8 [shape = 'u8[65536]{0}', space=vmem, size = 0x10000, scoped, tag = 'input window, operand 7, single buffered']
    #allocation9 [shape = 's32[1]{0}', space=sflag, size = 0x4, scoped, tag = 'scoped memory for predict_net_forward.1']
    #allocation10 [shape = 'u8[65536]{0}', space=vmem, size = 0x10000, scoped, tag = 'input window, operand 9, single buffered']
    #allocation11 [shape = 'u8[65536]{0}', space=vmem, size = 0x10000, scoped, tag = 'input window, operand 11, single buffered']
    #allocation12 [shape = 's32[1]{0}', space=sflag, size = 0x4, scoped, tag = 'scoped memory for predict_net_forward.1']
    %18 = vsyncpa [#allocation4], 0
    %19 = vsyncpa [#allocation6], 0
    %20 = vsyncpa [#allocation9], 0
    %21 = vsyncpa [#allocation12], 0
    // Predicated region
    $region2: #{predict_net_forward.1} parent=1 // pred_check
      _
    $region3: #{predict_net_forward.1} parent=1 // pred_check_branch
      %23 = sbr.rel (0) target = $region5
    $region4: #{predict_net_forward.1} parent=1 // pred_region
      _
    $region5: #{predict_net_forward.1} parent=1 // pred_fallthru
      _
    // Predicated region
    $region6: #{predict_net_forward.1} parent=1 // pred_check
      _
    $region7: #{predict_net_forward.1} parent=1 // pred_check_branch
      %25 = sbr.rel (0) target = $region9
    $region8: #{predict_net_forward.1} parent=1 // pred_region
      _
    $region9: #{predict_net_forward.1} parent=1 // pred_fallthru
      _
    // Predicated region
    $region10: #{predict_net_forward.1} parent=1 // pred_check
      _
    $region11: #{predict_net_forward.1} parent=1 // pred_check_branch
      %27 = sbr.rel (0) target = $region13
    $region12: #{predict_net_forward.1} parent=1 // pred_region
      %s29 = ssub.s32 1024, 1024
      %30 = vsyncadd [#allocation4], %s29
      %s31 = sshll.u32 [#allocation3], 4
      %s32 = int_to_ptr.vmem [resolvable:$true] %s31
      %37 = dma.hbm_to_vmem [thread:$0]  %s2, 1024, %s32, [#allocation4], 64, 64, 4
    $region13: #{predict_net_forward.1} parent=1 // pred_fallthru
      _
    // Predicated region
    $region14: #{predict_net_forward.1} parent=1 // pred_check
      _
    $region15: #{predict_net_forward.1} parent=1 // pred_check_branch
      %39 = sbr.rel (0) target = $region17
    $region16: #{predict_net_forward.1} parent=1 // pred_region
      %s41 = ssub.s32 131072, 131072
      %42 = vsyncadd [#allocation6], %s41
      %s43 = sshll.u32 [#allocation5], 4
      %s44 = int_to_ptr.vmem [resolvable:$true] %s43
      %49 = dma.hbm_to_vmem [thread:$0]  %s3, 131072, %s44, [#allocation6], 64, 64, 4
    $region17: #{predict_net_forward.1} parent=1 // pred_fallthru
      _
    // Predicated region
    $region18: #{predict_net_forward.1} parent=1 // pred_check
      _
    $region19: #{predict_net_forward.1} parent=1 // pred_check_branch
      %51 = sbr.rel (0) target = $region21
    $region20: #{predict_net_forward.1} parent=1 // pred_region
      _
    $region21: #{predict_net_forward.1} parent=1 // pred_fallthru
      _
    // Predicated region
    $region22: #{predict_net_forward.1} parent=1 // pred_check
      _
    $region23: #{predict_net_forward.1} parent=1 // pred_check_branch
      %53 = sbr.rel (0) target = $region25
    $region24: #{predict_net_forward.1} parent=1 // pred_region
      %s55 = ssub.s32 2048, 2048
      %56 = vsyncadd [#allocation6], %s55
      %s57 = sshll.u32 [#allocation7], 4
      %s58 = int_to_ptr.vmem [resolvable:$true] %s57
      %63 = dma.hbm_to_vmem [thread:$0]  %s5, 2048, %s58, [#allocation6], 128, 128, 8
    $region25: #{predict_net_forward.1} parent=1 // pred_fallthru
      _
    // Predicated region
    $region26: #{predict_net_forward.1} parent=1 // pred_check
      _
    $region27: #{predict_net_forward.1} parent=1 // pred_check_branch
      %65 = sbr.rel (0) target = $region29
    $region28: #{predict_net_forward.1} parent=1 // pred_region
      _
    $region29: #{predict_net_forward.1} parent=1 // pred_fallthru
      _
    // Predicated region
    $region30: #{predict_net_forward.1} parent=1 // pred_check
      _
    $region31: #{predict_net_forward.1} parent=1 // pred_check_branch
      %67 = sbr.rel (0) target = $region33
    $region32: #{predict_net_forward.1} parent=1 // pred_region
      %s69 = ssub.s32 2048, 2048
      %70 = vsyncadd [#allocation9], %s69
      %s71 = sshll.u32 [#allocation8], 4
      %s72 = int_to_ptr.vmem [resolvable:$true] %s71
      %77 = dma.hbm_to_vmem [thread:$0]  %s7, 2048, %s72, [#allocation9], 128, 128, 8
    $region33: #{predict_net_forward.1} parent=1 // pred_fallthru
      _
    // Predicated region
    $region34: #{predict_net_forward.1} parent=1 // pred_check
      _
    $region35: #{predict_net_forward.1} parent=1 // pred_check_branch
      %79 = sbr.rel (0) target = $region37
    $region36: #{predict_net_forward.1} parent=1 // pred_region
      _
    $region37: #{predict_net_forward.1} parent=1 // pred_fallthru
      _
    // Predicated region
    $region38: #{predict_net_forward.1} parent=1 // pred_check
      _
    $region39: #{predict_net_forward.1} parent=1 // pred_check_branch
      %81 = sbr.rel (0) target = $region41
    $region40: #{predict_net_forward.1} parent=1 // pred_region
      %s83 = ssub.s32 2048, 2048
      %84 = vsyncadd [#allocation9], %s83
      %s85 = sshll.u32 [#allocation10], 4
      %s86 = int_to_ptr.vmem [resolvable:$true] %s85
      %91 = dma.hbm_to_vmem [thread:$0]  %s9, 2048, %s86, [#allocation9], 128, 128, 8
    $region41: #{predict_net_forward.1} parent=1 // pred_fallthru
      _
    // Predicated region
    $region42: #{predict_net_forward.1} parent=1 // pred_check
      _
    $region43: #{predict_net_forward.1} parent=1 // pred_check_branch
      %93 = sbr.rel (0) target = $region45
    $region44: #{predict_net_forward.1} parent=1 // pred_region
      _
    $region45: #{predict_net_forward.1} parent=1 // pred_fallthru
      _
    // Predicated region
    $region46: #{predict_net_forward.1} parent=1 // pred_check
      _
    $region47: #{predict_net_forward.1} parent=1 // pred_check_branch
      %95 = sbr.rel (0) target = $region49
    $region48: #{predict_net_forward.1} parent=1 // pred_region
      %s97 = ssub.s32 2048, 2048
      %98 = vsyncadd [#allocation12], %s97
      %s99 = sshll.u32 [#allocation11], 4
      %s100 = int_to_ptr.vmem [resolvable:$true] %s99
      %105 = dma.hbm_to_vmem [thread:$0]  %s11, 2048, %s100, [#allocation12], 128, 128, 8
    $region49: #{predict_net_forward.1} parent=1 // pred_fallthru
      _
    // Predicated region
    $region50: #{predict_net_forward.1} parent=1 // pred_check
      _
    $region51: #{predict_net_forward.1} parent=1 // pred_check_branch
      %107 = sbr.rel (0) target = $region53
    $region52: #{predict_net_forward.1} parent=1 // pred_region
      _
    $region53: #{predict_net_forward.1} parent=1 // pred_fallthru
      _
    // Predicated region
    $region54: #{predict_net_forward.1} parent=1 // pred_check
      _
    $region55: #{predict_net_forward.1} parent=1 // pred_check_branch
      %109 = sbr.rel (0) target = $region57
    $region56: #{predict_net_forward.1} parent=1 // pred_region
      %110 = dma.done [#allocation4], 1024
    $region57: #{predict_net_forward.1} parent=1 // pred_fallthru
      _
    // Predicated region
    $region58: #{predict_net_forward.1} parent=1 // pred_check
      _
    $region59: #{predict_net_forward.1} parent=1 // pred_check_branch
      %112 = sbr.rel (0) target = $region61
    $region60: #{predict_net_forward.1} parent=1 // pred_region
      %113 = dma.done [#allocation6], 131072
    $region61: #{predict_net_forward.1} parent=1 // pred_fallthru
      _
    // Predicated region
    $region62: #{predict_net_forward.1} parent=1 // pred_check
      _
    $region63: #{predict_net_forward.1} parent=1 // pred_check_branch
      %115 = sbr.rel (0) target = $region65
    $region64: #{predict_net_forward.1} parent=1 // pred_region
      %116 = dma.done [#allocation6], 2048
    $region65: #{predict_net_forward.1} parent=1 // pred_fallthru
      _
    // Predicated region
    $region66: #{predict_net_forward.1} parent=1 // pred_check
      _
    $region67: #{predict_net_forward.1} parent=1 // pred_check_branch
      %118 = sbr.rel (0) target = $region69
    $region68: #{predict_net_forward.1} parent=1 // pred_region
      %119 = dma.done [#allocation9], 2048
    $region69: #{predict_net_forward.1} parent=1 // pred_fallthru
      _
    // Predicated region
    $region70: #{predict_net_forward.1} parent=1 // pred_check
      _
    $region71: #{predict_net_forward.1} parent=1 // pred_check_branch
      %121 = sbr.rel (0) target = $region73
    $region72: #{predict_net_forward.1} parent=1 // pred_region
      %122 = dma.done [#allocation9], 2048
    $region73: #{predict_net_forward.1} parent=1 // pred_fallthru
      _
    // Predicated region
    $region74: #{predict_net_forward.1} parent=1 // pred_check
      _
    $region75: #{predict_net_forward.1} parent=1 // pred_check_branch
      %124 = sbr.rel (0) target = $region77
    $region76: #{predict_net_forward.1} parent=1 // pred_region
      %125 = dma.done [#allocation12], 2048
    $region77: #{predict_net_forward.1} parent=1 // pred_fallthru
      _
    %v127 = vld [vmem:[#allocation3] sm:$0xf]
    %v128 = vld [vmem:[#allocation3 + $0x4] sm:$0xf]
    %v129 = vld [vmem:[#allocation3 + $0x8] sm:$0xf]
    %v130 = vld [vmem:[#allocation3 + $0xc] sm:$0xf]
    %v131 = vld [vmem:[#allocation3 + $0x10] sm:$0xf]
    %v132 = vld [vmem:[#allocation3 + $0x14] sm:$0xf]
    %v133 = vld [vmem:[#allocation3 + $0x18] sm:$0xf]
    %v134 = vld [vmem:[#allocation3 + $0x1c] sm:$0xf]
    %v135 = vld [vmem:[#allocation3 + $0x20] sm:$0xf]
    %v136 = vld [vmem:[#allocation3 + $0x24] sm:$0xf]
    %v137 = vld [vmem:[#allocation3 + $0x28] sm:$0xf]
    %v138 = vld [vmem:[#allocation3 + $0x2c] sm:$0xf]
    %v139 = vld [vmem:[#allocation3 + $0x30] sm:$0xf]
    %v140 = vld [vmem:[#allocation3 + $0x34] sm:$0xf]
    %v141 = vld [vmem:[#allocation3 + $0x38] sm:$0xf]
    %v142 = vld [vmem:[#allocation3 + $0x3c] sm:$0xf]
    %v143 = vld [vmem:[%s0] sm:$0xf]
    %v144 = vld [vmem:[%s0 + $0x4] sm:$0xf]
    %v145 = vld [vmem:[%s0 + $0x8] sm:$0xf]
    %v146 = vld [vmem:[%s0 + $0xc] sm:$0xf]
    %v147 = vld [vmem:[%s0 + $0x10] sm:$0xf]
    %v148 = vld [vmem:[%s0 + $0x14] sm:$0xf]
    %v149 = vld [vmem:[%s0 + $0x18] sm:$0xf]
    %v150 = vld [vmem:[%s0 + $0x1c] sm:$0xf]
    %v151 = vld [vmem:[%s0 + $0x20] sm:$0xf]
    %v152 = vld [vmem:[%s0 + $0x24] sm:$0xf]
    %v153 = vld [vmem:[%s0 + $0x28] sm:$0xf]
    %v154 = vld [vmem:[%s0 + $0x2c] sm:$0xf]
    %v155 = vld [vmem:[%s0 + $0x30] sm:$0xf]
    %v156 = vld [vmem:[%s0 + $0x34] sm:$0xf]
    %v157 = vld [vmem:[%s0 + $0x38] sm:$0xf]
    %v158 = vld [vmem:[%s0 + $0x3c] sm:$0xf]
    %v175 = vunpack.c.l.b16 %v127
    %v176 = vunpack.c.l.b16 %v128
    %v177 = vunpack.c.l.b16 %v129
    %v178 = vunpack.c.l.b16 %v130
    %v179 = vunpack.c.l.b16 %v131
    %v180 = vunpack.c.l.b16 %v132
    %v181 = vunpack.c.l.b16 %v133
    %v182 = vunpack.c.l.b16 %v134
    %v183 = vunpack.c.l.b16 %v135
    %v184 = vunpack.c.l.b16 %v136
    %v185 = vunpack.c.l.b16 %v137
    %v186 = vunpack.c.l.b16 %v138
    %v187 = vunpack.c.l.b16 %v139
    %v188 = vunpack.c.l.b16 %v140
    %v189 = vunpack.c.l.b16 %v141
    %v190 = vunpack.c.l.b16 %v142
    %v191 = vpack.c.b16 %v176, %v175
    %v192 = vpack.c.b16 %v178, %v177
    %v193 = vpack.c.b16 %v180, %v179
    %v194 = vpack.c.b16 %v182, %v181
    %v195 = vpack.c.b16 %v184, %v183
    %v196 = vpack.c.b16 %v186, %v185
    %v197 = vpack.c.b16 %v188, %v187
    %v198 = vpack.c.b16 %v190, %v189
    %v223 = vunpack.c.l.b16 %v143
    %v224 = vunpack.c.l.b16 %v144
    %v225 = vunpack.c.l.b16 %v145
    %v226 = vunpack.c.l.b16 %v146
    %v227 = vunpack.c.l.b16 %v147
    %v228 = vunpack.c.l.b16 %v148
    %v229 = vunpack.c.l.b16 %v149
    %v230 = vunpack.c.l.b16 %v150
    %v231 = vunpack.c.l.b16 %v151
    %v232 = vunpack.c.l.b16 %v152
    %v233 = vunpack.c.l.b16 %v153
    %v234 = vunpack.c.l.b16 %v154
    %v235 = vunpack.c.l.b16 %v155
    %v236 = vunpack.c.l.b16 %v156
    %v237 = vunpack.c.l.b16 %v157
    %v238 = vunpack.c.l.b16 %v158
    %v239 = vpack.c.b16 %v224, %v223
    %v240 = vpack.c.b16 %v226, %v225
    %v241 = vpack.c.b16 %v228, %v227
    %v242 = vpack.c.b16 %v230, %v229
    %v243 = vpack.c.b16 %v232, %v231
    %v244 = vpack.c.b16 %v234, %v233
    %v245 = vpack.c.b16 %v236, %v235
    %v246 = vpack.c.b16 %v238, %v237
    %255 = vmatprep.subr.bf16.mxu0 0
    %256 = vmatpush1.bf16.msra.mxu0 %v246
    %257 = vmatprep.subr.bf16.mxu0 0
    %258 = vmatpush1.bf16.msra.mxu0 %v245
    %259 = vmatprep.subr.bf16.mxu0 0
    %260 = vmatpush1.bf16.msra.mxu0 %v244
    %261 = vmatprep.subr.bf16.mxu0 0
    %262 = vmatpush1.bf16.msra.mxu0 %v243
    %263 = vmatprep.subr.bf16.mxu0 0
    %264 = vmatpush1.bf16.msra.mxu0 %v242
    %265 = vmatprep.subr.bf16.mxu0 0
    %266 = vmatpush1.bf16.msra.mxu0 %v241
    %267 = vmatprep.subr.bf16.mxu0 0
    %268 = vmatpush1.bf16.msra.mxu0 %v240
    %269 = vmatprep.subr.bf16.mxu0 0
    %270 = vmatpush1.bf16.msra.mxu0 %v239
    %271 = vmatprep.subr.bf16.mxu0 0
    %272 = vmatpush2.bf16.msra.mxu0 0
    %273 = vmatprep.subr.bf16.mxu0 0
    %274 = vmatpush2.bf16.msra.mxu0 0
    %275 = vmatprep.subr.bf16.mxu0 0
    %276 = vmatpush2.bf16.msra.mxu0 0
    %277 = vmatprep.subr.bf16.mxu0 0
    %278 = vmatpush2.bf16.msra.mxu0 0
    %279 = vmatprep.subr.bf16.mxu0 0
    %280 = vmatpush2.bf16.msra.mxu0 0
    %281 = vmatprep.subr.bf16.mxu0 0
    %282 = vmatpush2.bf16.msra.mxu0 0
    %283 = vmatprep.subr.bf16.mxu0 0
    %284 = vmatpush2.bf16.msra.mxu0 0
    %285 = vmatprep.subr.bf16.mxu0 0
    %286 = vmatpush2.bf16.msra.mxu0 0
    %287 = vmatprep.mubr.bf16.mxu0 0
    %288 = vmatmul.mubr.bf16.gmra.mxu0 %v191
    %v289 = vpop.f32.mrf.mxu0
    %v290 = vadd.f32 0.0, %v289
    %v291 = vpop.f32.mrf.mxu0
    %v292 = vpop.f32.mrf.mxu0
    %v293 = vadd.f32 0.0, %v292
    %v294 = vpop.f32.mrf.mxu0
    %295 = vmatprep.mubr.bf16.mxu0 0
    %296 = vmatmul.mubr.bf16.gmra.mxu0 %v192
    %v297 = vpop.f32.mrf.mxu0
    %v298 = vadd.f32 0.0, %v297
    %v299 = vpop.f32.mrf.mxu0
    %v300 = vpop.f32.mrf.mxu0
    %v301 = vadd.f32 0.0, %v300
    %v302 = vpop.f32.mrf.mxu0
    %303 = vmatprep.mubr.bf16.mxu0 0
    %304 = vmatmul.mubr.bf16.gmra.mxu0 %v193
    %v305 = vpop.f32.mrf.mxu0
    %v306 = vadd.f32 0.0, %v305
    %v307 = vpop.f32.mrf.mxu0
    %v308 = vpop.f32.mrf.mxu0
    %v309 = vadd.f32 0.0, %v308
    %v310 = vpop.f32.mrf.mxu0
    %311 = vmatprep.mubr.bf16.mxu0 0
    %312 = vmatmul.mubr.bf16.gmra.mxu0 %v194
    %v313 = vpop.f32.mrf.mxu0
    %v314 = vadd.f32 0.0, %v313
    %v315 = vpop.f32.mrf.mxu0
    %v316 = vpop.f32.mrf.mxu0
    %v317 = vadd.f32 0.0, %v316
    %v318 = vpop.f32.mrf.mxu0
    %319 = vmatprep.mubr.bf16.mxu0 0
    %320 = vmatmul.mubr.bf16.gmra.mxu0 %v195
    %v321 = vpop.f32.mrf.mxu0
    %v322 = vadd.f32 0.0, %v321
    %v323 = vpop.f32.mrf.mxu0
    %v324 = vpop.f32.mrf.mxu0
    %v325 = vadd.f32 0.0, %v324
    %v326 = vpop.f32.mrf.mxu0
    %327 = vmatprep.mubr.bf16.mxu0 0
    %328 = vmatmul.mubr.bf16.gmra.mxu0 %v196
    %v329 = vpop.f32.mrf.mxu0
    %v330 = vadd.f32 0.0, %v329
    %v331 = vpop.f32.mrf.mxu0
    %v332 = vpop.f32.mrf.mxu0
    %v333 = vadd.f32 0.0, %v332
    %v334 = vpop.f32.mrf.mxu0
    %335 = vmatprep.mubr.bf16.mxu0 0
    %336 = vmatmul.mubr.bf16.gmra.mxu0 %v197
    %v337 = vpop.f32.mrf.mxu0
    %v338 = vadd.f32 0.0, %v337
    %v339 = vpop.f32.mrf.mxu0
    %v340 = vpop.f32.mrf.mxu0
    %v341 = vadd.f32 0.0, %v340
    %v342 = vpop.f32.mrf.mxu0
    %343 = vmatprep.mubr.bf16.mxu0 0
    %344 = vmatmul.mubr.bf16.gmra.mxu0 %v198
    %v345 = vpop.f32.mrf.mxu0
    %v346 = vadd.f32 0.0, %v345
    %v347 = vpop.f32.mrf.mxu0
    %v348 = vpop.f32.mrf.mxu0
    %v349 = vadd.f32 0.0, %v348
    %v350 = vpop.f32.mrf.mxu0
    %351 = vdwg.mxu0
    %vm352 = vcmask 64512
    %353 = vst.msk [vmem:[#allocation2] sm:$0xff] %vm352, %v290
    %354 = vst.msk [vmem:[#allocation2 + $0x8] sm:$0xff] %vm352, %v293
    %355 = vst.msk [vmem:[#allocation2 + $0x10] sm:$0xff] %vm352, %v298
    %356 = vst.msk [vmem:[#allocation2 + $0x18] sm:$0xff] %vm352, %v301
    %357 = vst.msk [vmem:[#allocation2 + $0x20] sm:$0xff] %vm352, %v306
    %358 = vst.msk [vmem:[#allocation2 + $0x28] sm:$0xff] %vm352, %v309
    %359 = vst.msk [vmem:[#allocation2 + $0x30] sm:$0xff] %vm352, %v314
    %360 = vst.msk [vmem:[#allocation2 + $0x38] sm:$0xff] %vm352, %v317
    %361 = vst.msk [vmem:[#allocation2 + $0x40] sm:$0xff] %vm352, %v322
    %362 = vst.msk [vmem:[#allocation2 + $0x48] sm:$0xff] %vm352, %v325
    %363 = vst.msk [vmem:[#allocation2 + $0x50] sm:$0xff] %vm352, %v330
    %364 = vst.msk [vmem:[#allocation2 + $0x58] sm:$0xff] %vm352, %v333
    %365 = vst.msk [vmem:[#allocation2 + $0x60] sm:$0xff] %vm352, %v338
    %366 = vst.msk [vmem:[#allocation2 + $0x68] sm:$0xff] %vm352, %v341
    %367 = vst.msk [vmem:[#allocation2 + $0x70] sm:$0xff] %vm352, %v346
    %368 = vst.msk [vmem:[#allocation2 + $0x78] sm:$0xff] %vm352, %v349
    loop: start=0, step=1, limit=128
    $region78: #{predict_net_forward.1} parent=1 // loop_pre_header
      _
    $region79: #{predict_net_forward.1} parent=1 // loop_header
      %s370 = sphi 0, %s374
      %p371 = scmp.ge.s32.totalorder %s370, 128
    $region80: #{predict_net_forward.1} parent=1 // loop_header_branch
      %373 = sbr.rel (%p371) target = $region84
    $region81: #{predict_net_forward.1} parent=1 // loop_body
      %s375 = sadd.s32 %s370, 1
      %s376 = scalar_lea.vmem %s1, %s375
      %v377 = vld [vmem:[%s376] sm:$0x1]
      %s378 = sadd.s32 %s370, 137
      %s379 = scalar_lea.vmem %s1, %s378
      %v380 = vld [vmem:[%s379] sm:$0x1]
      %s381 = sadd.s32 %s370, 273
      %s382 = scalar_lea.vmem %s1, %s381
      %v383 = vld [vmem:[%s382] sm:$0x1]
      %v384 = vld [vmem:[%s1] sm:$0xff]
      %v385 = vld [vmem:[%s1 + $0x8] sm:$0xff]
      %v386 = vld [vmem:[%s1 + $0x10] sm:$0xff]
      %v387 = vld [vmem:[%s1 + $0x18] sm:$0xff]
      %v388 = vld [vmem:[%s1 + $0x20] sm:$0xff]
      %v389 = vld [vmem:[%s1 + $0x28] sm:$0xff]
      %v390 = vld [vmem:[%s1 + $0x30] sm:$0xff]
      %v391 = vld [vmem:[%s1 + $0x38] sm:$0xff]
      %v392 = vld [vmem:[%s1 + $0x40] sm:$0xff]
      %v393 = vld [vmem:[%s1 + $0x48] sm:$0xff]
      %v394 = vld [vmem:[%s1 + $0x50] sm:$0xff]
      %v395 = vld [vmem:[%s1 + $0x58] sm:$0xff]
      %v396 = vld [vmem:[%s1 + $0x60] sm:$0xff]
      %v397 = vld [vmem:[%s1 + $0x68] sm:$0xff]
      %v398 = vld [vmem:[%s1 + $0x70] sm:$0xff]
      %v399 = vld [vmem:[%s1 + $0x78] sm:$0xff]
      %v400 = vlaneseq
      %v401 = vshrl.u32 %v400, 7
      %v402 = vsub.s32 0, %v401
      %v403 = vrot.slane %v377, %v402
      %v404 = vsub.f32 %v403, %v384
      %v405 = vsub.f32 %v403, %v385
      %v406 = vsub.f32 %v403, %v386
      %v407 = vsub.f32 %v403, %v387
      %v408 = vsub.f32 %v403, %v388
      %v409 = vsub.f32 %v403, %v389
      %v410 = vsub.f32 %v403, %v390
      %v411 = vsub.f32 %v403, %v391
      %v412 = vsub.f32 %v403, %v392
      %v413 = vsub.f32 %v403, %v393
      %v414 = vsub.f32 %v403, %v394
      %v415 = vsub.f32 %v403, %v395
      %v416 = vsub.f32 %v403, %v396
      %v417 = vsub.f32 %v403, %v397
      %v418 = vsub.f32 %v403, %v398
      %v419 = vsub.f32 %v403, %v399
      %v420 = vld [vmem:[%s1 + $0x88] sm:$0xff]
      %v421 = vld [vmem:[%s1 + $0x90] sm:$0xff]
      %v422 = vld [vmem:[%s1 + $0x98] sm:$0xff]
      %v423 = vld [vmem:[%s1 + $0xa0] sm:$0xff]
      %v424 = vld [vmem:[%s1 + $0xa8] sm:$0xff]
      %v425 = vld [vmem:[%s1 + $0xb0] sm:$0xff]
      %v426 = vld [vmem:[%s1 + $0xb8] sm:$0xff]
      %v427 = vld [vmem:[%s1 + $0xc0] sm:$0xff]
      %v428 = vld [vmem:[%s1 + $0xc8] sm:$0xff]
      %v429 = vld [vmem:[%s1 + $0xd0] sm:$0xff]
      %v430 = vld [vmem:[%s1 + $0xd8] sm:$0xff]
      %v431 = vld [vmem:[%s1 + $0xe0] sm:$0xff]
      %v432 = vld [vmem:[%s1 + $0xe8] sm:$0xff]
      %v433 = vld [vmem:[%s1 + $0xf0] sm:$0xff]
      %v434 = vld [vmem:[%s1 + $0xf8] sm:$0xff]
      %v435 = vld [vmem:[%s1 + $0x100] sm:$0xff]
      %v436 = vlaneseq
      %v437 = vshrl.u32 %v436, 7
      %v438 = vsub.s32 0, %v437
      %v439 = vrot.slane %v380, %v438
      %v440 = vsub.f32 %v439, %v420
      %v441 = vsub.f32 %v439, %v421
      %v442 = vsub.f32 %v439, %v422
      %v443 = vsub.f32 %v439, %v423
      %v444 = vsub.f32 %v439, %v424
      %v445 = vsub.f32 %v439, %v425
      %v446 = vsub.f32 %v439, %v426
      %v447 = vsub.f32 %v439, %v427
      %v448 = vsub.f32 %v439, %v428
      %v449 = vsub.f32 %v439, %v429
      %v450 = vsub.f32 %v439, %v430
      %v451 = vsub.f32 %v439, %v431
      %v452 = vsub.f32 %v439, %v432
      %v453 = vsub.f32 %v439, %v433
      %v454 = vsub.f32 %v439, %v434
      %v455 = vsub.f32 %v439, %v435
      %v456 = vld [vmem:[%s1 + $0x110] sm:$0xff]
      %v457 = vld [vmem:[%s1 + $0x118] sm:$0xff]
      %v458 = vld [vmem:[%s1 + $0x120] sm:$0xff]
      %v459 = vld [vmem:[%s1 + $0x128] sm:$0xff]
      %v460 = vld [vmem:[%s1 + $0x130] sm:$0xff]
      %v461 = vld [vmem:[%s1 + $0x138] sm:$0xff]
      %v462 = vld [vmem:[%s1 + $0x140] sm:$0xff]
      %v463 = vld [vmem:[%s1 + $0x148] sm:$0xff]
      %v464 = vld [vmem:[%s1 + $0x150] sm:$0xff]
      %v465 = vld [vmem:[%s1 + $0x158] sm:$0xff]
      %v466 = vld [vmem:[%s1 + $0x160] sm:$0xff]
      %v467 = vld [vmem:[%s1 + $0x168] sm:$0xff]
      %v468 = vld [vmem:[%s1 + $0x170] sm:$0xff]
      %v469 = vld [vmem:[%s1 + $0x178] sm:$0xff]
      %v470 = vld [vmem:[%s1 + $0x180] sm:$0xff]
      %v471 = vld [vmem:[%s1 + $0x188] sm:$0xff]
      %v472 = vlaneseq
      %v473 = vshrl.u32 %v472, 7
      %v474 = vsub.s32 0, %v473
      %v475 = vrot.slane %v383, %v474
      %v476 = vsub.f32 %v475, %v456
      %v477 = vsub.f32 %v475, %v457
      %v478 = vsub.f32 %v475, %v458
      %v479 = vsub.f32 %v475, %v459
      %v480 = vsub.f32 %v475, %v460
      %v481 = vsub.f32 %v475, %v461
      %v482 = vsub.f32 %v475, %v462
      %v483 = vsub.f32 %v475, %v463
      %v484 = vsub.f32 %v475, %v464
      %v485 = vsub.f32 %v475, %v465
      %v486 = vsub.f32 %v475, %v466
      %v487 = vsub.f32 %v475, %v467
      %v488 = vsub.f32 %v475, %v468
      %v489 = vsub.f32 %v475, %v469
      %v490 = vsub.f32 %v475, %v470
      %v491 = vsub.f32 %v475, %v471
      %v492 = vmul.f32 %v404, %v404
      %v493 = vmul.f32 %v405, %v405
      %v494 = vmul.f32 %v406, %v406
      %v495 = vmul.f32 %v407, %v407
      %v496 = vmul.f32 %v408, %v408
      %v497 = vmul.f32 %v409, %v409
      %v498 = vmul.f32 %v410, %v410
      %v499 = vmul.f32 %v411, %v411
      %v500 = vmul.f32 %v412, %v412
      %v501 = vmul.f32 %v413, %v413
      %v502 = vmul.f32 %v414, %v414
      %v503 = vmul.f32 %v415, %v415
      %v504 = vmul.f32 %v416, %v416
      %v505 = vmul.f32 %v417, %v417
      %v506 = vmul.f32 %v418, %v418
      %v507 = vmul.f32 %v419, %v419
      %v508 = vmul.f32 %v440, %v440
      %v509 = vmul.f32 %v441, %v441
      %v510 = vmul.f32 %v442, %v442
      %v511 = vmul.f32 %v443, %v443
      %v512 = vmul.f32 %v444, %v444
      %v513 = vmul.f32 %v445, %v445
      %v514 = vmul.f32 %v446, %v446
      %v515 = vmul.f32 %v447, %v447
      %v516 = vmul.f32 %v448, %v448
      %v517 = vmul.f32 %v449, %v449
      %v518 = vmul.f32 %v450, %v450
      %v519 = vmul.f32 %v451, %v451
      %v520 = vmul.f32 %v452, %v452
      %v521 = vmul.f32 %v453, %v453
      %v522 = vmul.f32 %v454, %v454
      %v523 = vmul.f32 %v455, %v455
      %v524 = vadd.f32 %v492, %v508
      %v525 = vadd.f32 %v493, %v509
      %v526 = vadd.f32 %v494, %v510
      %v527 = vadd.f32 %v495, %v511
      %v528 = vadd.f32 %v496, %v512
      %v529 = vadd.f32 %v497, %v513
      %v530 = vadd.f32 %v498, %v514
      %v531 = vadd.f32 %v499, %v515
      %v532 = vadd.f32 %v500, %v516
      %v533 = vadd.f32 %v501, %v517
      %v534 = vadd.f32 %v502, %v518
      %v535 = vadd.f32 %v503, %v519
      %v536 = vadd.f32 %v504, %v520
      %v537 = vadd.f32 %v505, %v521
      %v538 = vadd.f32 %v506, %v522
      %v539 = vadd.f32 %v507, %v523
      %v540 = vmul.f32 %v476, %v476
      %v541 = vmul.f32 %v477, %v477
      %v542 = vmul.f32 %v478, %v478
      %v543 = vmul.f32 %v479, %v479
      %v544 = vmul.f32 %v480, %v480
      %v545 = vmul.f32 %v481, %v481
      %v546 = vmul.f32 %v482, %v482
      %v547 = vmul.f32 %v483, %v483
      %v548 = vmul.f32 %v484, %v484
      %v549 = vmul.f32 %v485, %v485
      %v550 = vmul.f32 %v486, %v486
      %v551 = vmul.f32 %v487, %v487
      %v552 = vmul.f32 %v488, %v488
      %v553 = vmul.f32 %v489, %v489
      %v554 = vmul.f32 %v490, %v490
      %v555 = vmul.f32 %v491, %v491
      %v556 = vadd.f32 %v524, %v540
      %v557 = vadd.f32 %v525, %v541
      %v558 = vadd.f32 %v526, %v542
      %v559 = vadd.f32 %v527, %v543
      %v560 = vadd.f32 %v528, %v544
      %v561 = vadd.f32 %v529, %v545
      %v562 = vadd.f32 %v530, %v546
      %v563 = vadd.f32 %v531, %v547
      %v564 = vadd.f32 %v532, %v548
      %v565 = vadd.f32 %v533, %v549
      %v566 = vadd.f32 %v534, %v550
      %v567 = vadd.f32 %v535, %v551
      %v568 = vadd.f32 %v536, %v552
      %v569 = vadd.f32 %v537, %v553
      %v570 = vadd.f32 %v538, %v554
      %v571 = vadd.f32 %v539, %v555
      %v572 = vmax.f32 %v556, 1e-20
      %v573 = vmax.f32 %v557, 1e-20
      %v574 = vmax.f32 %v558, 1e-20
      %v575 = vmax.f32 %v559, 1e-20
      %v576 = vmax.f32 %v560, 1e-20
      %v577 = vmax.f32 %v561, 1e-20
      %v578 = vmax.f32 %v562, 1e-20
      %v579 = vmax.f32 %v563, 1e-20
      %v580 = vmax.f32 %v564, 1e-20
      %v581 = vmax.f32 %v565, 1e-20
      %v582 = vmax.f32 %v566, 1e-20
      %v583 = vmax.f32 %v567, 1e-20
      %v584 = vmax.f32 %v568, 1e-20
      %v585 = vmax.f32 %v569, 1e-20
      %v586 = vmax.f32 %v570, 1e-20
      %v587 = vmax.f32 %v571, 1e-20
      %v588 = vrcp.pop %v572
      %v589 = vrcp.pop %v573
      %v590 = vrcp.pop %v574
      %v591 = vrcp.pop %v575
      %v592 = vrcp.pop %v576
      %v593 = vrcp.pop %v577
      %v594 = vrcp.pop %v578
      %v595 = vrcp.pop %v579
      %v596 = vrcp.pop %v580
      %v597 = vrcp.pop %v581
      %v598 = vrcp.pop %v582
      %v599 = vrcp.pop %v583
      %v600 = vrcp.pop %v584
      %v601 = vrcp.pop %v585
      %v602 = vrcp.pop %v586
      %v603 = vrcp.pop %v587
      %v604 = vpack.c.bf16 %v589, %v588
      %v605 = vpack.c.bf16 %v591, %v590
      %v606 = vpack.c.bf16 %v593, %v592
      %v607 = vpack.c.bf16 %v595, %v594
      %v608 = vpack.c.bf16 %v597, %v596
      %v609 = vpack.c.bf16 %v599, %v598
      %v610 = vpack.c.bf16 %v601, %v600
      %v611 = vpack.c.bf16 %v603, %v602
      %v612 = vld [vmem:[#allocation2] sm:$0xff]
      %v613 = vld [vmem:[#allocation2 + $0x8] sm:$0xff]
      %v614 = vld [vmem:[#allocation2 + $0x10] sm:$0xff]
      %v615 = vld [vmem:[#allocation2 + $0x18] sm:$0xff]
      %v616 = vld [vmem:[#allocation2 + $0x20] sm:$0xff]
      %v617 = vld [vmem:[#allocation2 + $0x28] sm:$0xff]
      %v618 = vld [vmem:[#allocation2 + $0x30] sm:$0xff]
      %v619 = vld [vmem:[#allocation2 + $0x38] sm:$0xff]
      %v620 = vld [vmem:[#allocation2 + $0x40] sm:$0xff]
      %v621 = vld [vmem:[#allocation2 + $0x48] sm:$0xff]
      %v622 = vld [vmem:[#allocation2 + $0x50] sm:$0xff]
      %v623 = vld [vmem:[#allocation2 + $0x58] sm:$0xff]
      %v624 = vld [vmem:[#allocation2 + $0x60] sm:$0xff]
      %v625 = vld [vmem:[#allocation2 + $0x68] sm:$0xff]
      %v626 = vld [vmem:[#allocation2 + $0x70] sm:$0xff]
      %v627 = vld [vmem:[#allocation2 + $0x78] sm:$0xff]
      %s628 = smul.u32 %s370, 16
      %s629 = smul.addr %s628, 4
      %s630 = scalar_lea.vmem [#allocation5], %s629
      %v631 = vld [vmem:[%s630] sm:$0xf]
      %v632 = vld [vmem:[%s630 + $0x4] sm:$0xf]
      %v633 = vld [vmem:[%s630 + $0x8] sm:$0xf]
      %v634 = vld [vmem:[%s630 + $0xc] sm:$0xf]
      %v635 = vld [vmem:[%s630 + $0x10] sm:$0xf]
      %v636 = vld [vmem:[%s630 + $0x14] sm:$0xf]
      %v637 = vld [vmem:[%s630 + $0x18] sm:$0xf]
      %v638 = vld [vmem:[%s630 + $0x1c] sm:$0xf]
      %v639 = vld [vmem:[%s630 + $0x20] sm:$0xf]
      %v640 = vld [vmem:[%s630 + $0x24] sm:$0xf]
      %v641 = vld [vmem:[%s630 + $0x28] sm:$0xf]
      %v642 = vld [vmem:[%s630 + $0x2c] sm:$0xf]
      %v643 = vld [vmem:[%s630 + $0x30] sm:$0xf]
      %v644 = vld [vmem:[%s630 + $0x34] sm:$0xf]
      %v645 = vld [vmem:[%s630 + $0x38] sm:$0xf]
      %v646 = vld [vmem:[%s630 + $0x3c] sm:$0xf]
      %v663 = vunpack.c.l.b16 %v631
      %v664 = vunpack.c.l.b16 %v632
      %v665 = vunpack.c.l.b16 %v633
      %v666 = vunpack.c.l.b16 %v634
      %v667 = vunpack.c.l.b16 %v635
      %v668 = vunpack.c.l.b16 %v636
      %v669 = vunpack.c.l.b16 %v637
      %v670 = vunpack.c.l.b16 %v638
      %v671 = vunpack.c.l.b16 %v639
      %v672 = vunpack.c.l.b16 %v640
      %v673 = vunpack.c.l.b16 %v641
      %v674 = vunpack.c.l.b16 %v642
      %v675 = vunpack.c.l.b16 %v643
      %v676 = vunpack.c.l.b16 %v644
      %v677 = vunpack.c.l.b16 %v645
      %v678 = vunpack.c.l.b16 %v646
      %v679 = vpack.c.b16 %v664, %v663
      %v680 = vpack.c.b16 %v666, %v665
      %v681 = vpack.c.b16 %v668, %v667
      %v682 = vpack.c.b16 %v670, %v669
      %v683 = vpack.c.b16 %v672, %v671
      %v684 = vpack.c.b16 %v674, %v673
      %v685 = vpack.c.b16 %v676, %v675
      %v686 = vpack.c.b16 %v678, %v677
      %695 = vmatprep.subr.bf16.mxu0 0
      %696 = vmatpush1.bf16.msra.mxu0 %v611
      %697 = vmatprep.subr.bf16.mxu0 0
      %698 = vmatpush1.bf16.msra.mxu0 %v610
      %699 = vmatprep.subr.bf16.mxu0 0
      %700 = vmatpush1.bf16.msra.mxu0 %v609
      %701 = vmatprep.subr.bf16.mxu0 0
      %702 = vmatpush1.bf16.msra.mxu0 %v608
      %703 = vmatprep.subr.bf16.mxu0 0
      %704 = vmatpush1.bf16.msra.mxu0 %v607
      %705 = vmatprep.subr.bf16.mxu0 0
      %706 = vmatpush1.bf16.msra.mxu0 %v606
      %707 = vmatprep.subr.bf16.mxu0 0
      %708 = vmatpush1.bf16.msra.mxu0 %v605
      %709 = vmatprep.subr.bf16.mxu0 0
      %710 = vmatpush1.bf16.msra.mxu0 %v604
      %711 = vmatprep.subr.bf16.mxu0 0
      %712 = vmatpush2.bf16.msra.mxu0 0
      %713 = vmatprep.subr.bf16.mxu0 0
      %714 = vmatpush2.bf16.msra.mxu0 0
      %715 = vmatprep.subr.bf16.mxu0 0
      %716 = vmatpush2.bf16.msra.mxu0 0
      %717 = vmatprep.subr.bf16.mxu0 0
      %718 = vmatpush2.bf16.msra.mxu0 0
      %719 = vmatprep.subr.bf16.mxu0 0
      %720 = vmatpush2.bf16.msra.mxu0 0
      %721 = vmatprep.subr.bf16.mxu0 0
      %722 = vmatpush2.bf16.msra.mxu0 0
      %723 = vmatprep.subr.bf16.mxu0 0
      %724 = vmatpush2.bf16.msra.mxu0 0
      %725 = vmatprep.subr.bf16.mxu0 0
      %726 = vmatpush2.bf16.msra.mxu0 0
      %727 = vmatprep.mubr.bf16.mxu0 0
      %728 = vmatmul.mubr.bf16.gmra.mxu0 %v679
      %v729 = vpop.f32.mrf.mxu0
      %v730 = vadd.f32 0.0, %v729
      %v731 = vpop.f32.mrf.mxu0
      %v732 = vpop.f32.mrf.mxu0
      %v733 = vadd.f32 0.0, %v732
      %v734 = vpop.f32.mrf.mxu0
      %735 = vmatprep.mubr.bf16.mxu0 0
      %736 = vmatmul.mubr.bf16.gmra.mxu0 %v680
      %v737 = vpop.f32.mrf.mxu0
      %v738 = vadd.f32 0.0, %v737
      %v739 = vpop.f32.mrf.mxu0
      %v740 = vpop.f32.mrf.mxu0
      %v741 = vadd.f32 0.0, %v740
      %v742 = vpop.f32.mrf.mxu0
      %743 = vmatprep.mubr.bf16.mxu0 0
      %744 = vmatmul.mubr.bf16.gmra.mxu0 %v681
      %v745 = vpop.f32.mrf.mxu0
      %v746 = vadd.f32 0.0, %v745
      %v747 = vpop.f32.mrf.mxu0
      %v748 = vpop.f32.mrf.mxu0
      %v749 = vadd.f32 0.0, %v748
      %v750 = vpop.f32.mrf.mxu0
      %751 = vmatprep.mubr.bf16.mxu0 0
      %752 = vmatmul.mubr.bf16.gmra.mxu0 %v682
      %v753 = vpop.f32.mrf.mxu0
      %v754 = vadd.f32 0.0, %v753
      %v755 = vpop.f32.mrf.mxu0
      %v756 = vpop.f32.mrf.mxu0
      %v757 = vadd.f32 0.0, %v756
      %v758 = vpop.f32.mrf.mxu0
      %759 = vmatprep.mubr.bf16.mxu0 0
      %760 = vmatmul.mubr.bf16.gmra.mxu0 %v683
      %v761 = vpop.f32.mrf.mxu0
      %v762 = vadd.f32 0.0, %v761
      %v763 = vpop.f32.mrf.mxu0
      %v764 = vpop.f32.mrf.mxu0
      %v765 = vadd.f32 0.0, %v764
      %v766 = vpop.f32.mrf.mxu0
      %767 = vmatprep.mubr.bf16.mxu0 0
      %768 = vmatmul.mubr.bf16.gmra.mxu0 %v684
      %v769 = vpop.f32.mrf.mxu0
      %v770 = vadd.f32 0.0, %v769
      %v771 = vpop.f32.mrf.mxu0
      %v772 = vpop.f32.mrf.mxu0
      %v773 = vadd.f32 0.0, %v772
      %v774 = vpop.f32.mrf.mxu0
      %775 = vmatprep.mubr.bf16.mxu0 0
      %776 = vmatmul.mubr.bf16.gmra.mxu0 %v685
      %v777 = vpop.f32.mrf.mxu0
      %v778 = vadd.f32 0.0, %v777
      %v779 = vpop.f32.mrf.mxu0
      %v780 = vpop.f32.mrf.mxu0
      %v781 = vadd.f32 0.0, %v780
      %v782 = vpop.f32.mrf.mxu0
      %783 = vmatprep.mubr.bf16.mxu0 0
      %784 = vmatmul.mubr.bf16.gmra.mxu0 %v686
      %v785 = vpop.f32.mrf.mxu0
      %v786 = vadd.f32 0.0, %v785
      %v787 = vpop.f32.mrf.mxu0
      %v788 = vpop.f32.mrf.mxu0
      %v789 = vadd.f32 0.0, %v788
      %v790 = vpop.f32.mrf.mxu0
      %791 = vdwg.mxu0
      %v792 = vadd.f32 %v612, %v730
      %v793 = vadd.f32 %v613, %v733
      %v794 = vadd.f32 %v614, %v738
      %v795 = vadd.f32 %v615, %v741
      %v796 = vadd.f32 %v616, %v746
      %v797 = vadd.f32 %v617, %v749
      %v798 = vadd.f32 %v618, %v754
      %v799 = vadd.f32 %v619, %v757
      %v800 = vadd.f32 %v620, %v762
      %v801 = vadd.f32 %v621, %v765
      %v802 = vadd.f32 %v622, %v770
      %v803 = vadd.f32 %v623, %v773
      %v804 = vadd.f32 %v624, %v778
      %v805 = vadd.f32 %v625, %v781
      %v806 = vadd.f32 %v626, %v786
      %v807 = vadd.f32 %v627, %v789
      %808 = vst.msk [vmem:[#allocation2] sm:$0xff] %vm352, %v792
      %809 = vst.msk [vmem:[#allocation2 + $0x8] sm:$0xff] %vm352, %v793
      %810 = vst.msk [vmem:[#allocation2 + $0x10] sm:$0xff] %vm352, %v794
      %811 = vst.msk [vmem:[#allocation2 + $0x18] sm:$0xff] %vm352, %v795
      %812 = vst.msk [vmem:[#allocation2 + $0x20] sm:$0xff] %vm352, %v796
      %813 = vst.msk [vmem:[#allocation2 + $0x28] sm:$0xff] %vm352, %v797
      %814 = vst.msk [vmem:[#allocation2 + $0x30] sm:$0xff] %vm352, %v798
      %815 = vst.msk [vmem:[#allocation2 + $0x38] sm:$0xff] %vm352, %v799
      %816 = vst.msk [vmem:[#allocation2 + $0x40] sm:$0xff] %vm352, %v800
      %817 = vst.msk [vmem:[#allocation2 + $0x48] sm:$0xff] %vm352, %v801
      %818 = vst.msk [vmem:[#allocation2 + $0x50] sm:$0xff] %vm352, %v802
      %819 = vst.msk [vmem:[#allocation2 + $0x58] sm:$0xff] %vm352, %v803
      %820 = vst.msk [vmem:[#allocation2 + $0x60] sm:$0xff] %vm352, %v804
      %821 = vst.msk [vmem:[#allocation2 + $0x68] sm:$0xff] %vm352, %v805
      %822 = vst.msk [vmem:[#allocation2 + $0x70] sm:$0xff] %vm352, %v806
      %823 = vst.msk [vmem:[#allocation2 + $0x78] sm:$0xff] %vm352, %v807
    $region82: #{predict_net_forward.1} parent=1 // loop_footer
      %s374 = sadd.s32 1, %s370
    $region83: #{predict_net_forward.1} parent=1 // loop_footer_branch
      %369 = sbr.rel target = $region79
    $region84: #{predict_net_forward.1} parent=1 // loop_exit
      _
    %v824 = vld [vmem:[#allocation2] sm:$0xff]
    %v825 = vld [vmem:[#allocation2 + $0x8] sm:$0xff]
    %v826 = vld [vmem:[#allocation2 + $0x10] sm:$0xff]
    %v827 = vld [vmem:[#allocation2 + $0x18] sm:$0xff]
    %v828 = vld [vmem:[#allocation2 + $0x20] sm:$0xff]
    %v829 = vld [vmem:[#allocation2 + $0x28] sm:$0xff]
    %v830 = vld [vmem:[#allocation2 + $0x30] sm:$0xff]
    %v831 = vld [vmem:[#allocation2 + $0x38] sm:$0xff]
    %v832 = vld [vmem:[#allocation2 + $0x40] sm:$0xff]
    %v833 = vld [vmem:[#allocation2 + $0x48] sm:$0xff]
    %v834 = vld [vmem:[#allocation2 + $0x50] sm:$0xff]
    %v835 = vld [vmem:[#allocation2 + $0x58] sm:$0xff]
    %v836 = vld [vmem:[#allocation2 + $0x60] sm:$0xff]
    %v837 = vld [vmem:[#allocation2 + $0x68] sm:$0xff]
    %v838 = vld [vmem:[#allocation2 + $0x70] sm:$0xff]
    %v839 = vld [vmem:[#allocation2 + $0x78] sm:$0xff]
    %v840 = vld [vmem:[%s4] sm:$0xff]
    %v841 = vld [vmem:[%s4 + $0x8] sm:$0xff]
    %v842 = vld [vmem:[%s4 + $0x10] sm:$0xff]
    %v843 = vld [vmem:[%s4 + $0x18] sm:$0xff]
    %v844 = vld [vmem:[%s4 + $0x20] sm:$0xff]
    %v845 = vld [vmem:[%s4 + $0x28] sm:$0xff]
    %v846 = vld [vmem:[%s4 + $0x30] sm:$0xff]
    %v847 = vld [vmem:[%s4 + $0x38] sm:$0xff]
    %v848 = vld [vmem:[%s4 + $0x40] sm:$0xff]
    %v849 = vld [vmem:[%s4 + $0x48] sm:$0xff]
    %v850 = vld [vmem:[%s4 + $0x50] sm:$0xff]
    %v851 = vld [vmem:[%s4 + $0x58] sm:$0xff]
    %v852 = vld [vmem:[%s4 + $0x60] sm:$0xff]
    %v853 = vld [vmem:[%s4 + $0x68] sm:$0xff]
    %v854 = vld [vmem:[%s4 + $0x70] sm:$0xff]
    %v855 = vld [vmem:[%s4 + $0x78] sm:$0xff]
    %857 = vset.pattern.permute.xlu0 0
    %858 = vperm.xlu0 %857, %v840
    %v859 = vpop.permute.xlu0 %858
    %862 = vset.pattern.permute.xlu0 0
    %863 = vperm.xlu0 %862, %v841
    %v864 = vpop.permute.xlu0 %863
    %867 = vset.pattern.permute.xlu0 0
    %868 = vperm.xlu0 %867, %v842
    %v869 = vpop.permute.xlu0 %868
    %872 = vset.pattern.permute.xlu0 0
    %873 = vperm.xlu0 %872, %v843
    %v874 = vpop.permute.xlu0 %873
    %877 = vset.pattern.permute.xlu0 0
    %878 = vperm.xlu0 %877, %v844
    %v879 = vpop.permute.xlu0 %878
    %882 = vset.pattern.permute.xlu0 0
    %883 = vperm.xlu0 %882, %v845
    %v884 = vpop.permute.xlu0 %883
    %887 = vset.pattern.permute.xlu0 0
    %888 = vperm.xlu0 %887, %v846
    %v889 = vpop.permute.xlu0 %888
    %892 = vset.pattern.permute.xlu0 0
    %893 = vperm.xlu0 %892, %v847
    %v894 = vpop.permute.xlu0 %893
    %897 = vset.pattern.permute.xlu0 0
    %898 = vperm.xlu0 %897, %v848
    %v899 = vpop.permute.xlu0 %898
    %902 = vset.pattern.permute.xlu0 0
    %903 = vperm.xlu0 %902, %v849
    %v904 = vpop.permute.xlu0 %903
    %907 = vset.pattern.permute.xlu0 0
    %908 = vperm.xlu0 %907, %v850
    %v909 = vpop.permute.xlu0 %908
    %912 = vset.pattern.permute.xlu0 0
    %913 = vperm.xlu0 %912, %v851
    %v914 = vpop.permute.xlu0 %913
    %917 = vset.pattern.permute.xlu0 0
    %918 = vperm.xlu0 %917, %v852
    %v919 = vpop.permute.xlu0 %918
    %922 = vset.pattern.permute.xlu0 0
    %923 = vperm.xlu0 %922, %v853
    %v924 = vpop.permute.xlu0 %923
    %927 = vset.pattern.permute.xlu0 0
    %928 = vperm.xlu0 %927, %v854
    %v929 = vpop.permute.xlu0 %928
    %932 = vset.pattern.permute.xlu0 0
    %933 = vperm.xlu0 %932, %v855
    %v934 = vpop.permute.xlu0 %933
    %v936 = vadd.f32 %v824, %v859
    %v937 = vadd.f32 %v825, %v864
    %v938 = vadd.f32 %v826, %v869
    %v939 = vadd.f32 %v827, %v874
    %v940 = vadd.f32 %v828, %v879
    %v941 = vadd.f32 %v829, %v884
    %v942 = vadd.f32 %v830, %v889
    %v943 = vadd.f32 %v831, %v894
    %v944 = vadd.f32 %v832, %v899
    %v945 = vadd.f32 %v833, %v904
    %v946 = vadd.f32 %v834, %v909
    %v947 = vadd.f32 %v835, %v914
    %v948 = vadd.f32 %v836, %v919
    %v949 = vadd.f32 %v837, %v924
    %v950 = vadd.f32 %v838, %v929
    %v951 = vadd.f32 %v839, %v934
    %vm952 = vcmp.gt.f32.partialorder %v936, 0.0
    %vm953 = vcmp.gt.f32.partialorder %v937, 0.0
    %vm954 = vcmp.gt.f32.partialorder %v938, 0.0
    %vm955 = vcmp.gt.f32.partialorder %v939, 0.0
    %vm956 = vcmp.gt.f32.partialorder %v940, 0.0
    %vm957 = vcmp.gt.f32.partialorder %v941, 0.0
    %vm958 = vcmp.gt.f32.partialorder %v942, 0.0
    %vm959 = vcmp.gt.f32.partialorder %v943, 0.0
    %vm960 = vcmp.gt.f32.partialorder %v944, 0.0
    %vm961 = vcmp.gt.f32.partialorder %v945, 0.0
    %vm962 = vcmp.gt.f32.partialorder %v946, 0.0
    %vm963 = vcmp.gt.f32.partialorder %v947, 0.0
    %vm964 = vcmp.gt.f32.partialorder %v948, 0.0
    %vm965 = vcmp.gt.f32.partialorder %v949, 0.0
    %vm966 = vcmp.gt.f32.partialorder %v950, 0.0
    %vm967 = vcmp.gt.f32.partialorder %v951, 0.0
    %v968 = vmul.f32 %v936, 0.01
    %v969 = vmul.f32 %v937, 0.01
    %v970 = vmul.f32 %v938, 0.01
    %v971 = vmul.f32 %v939, 0.01
    %v972 = vmul.f32 %v940, 0.01
    %v973 = vmul.f32 %v941, 0.01
    %v974 = vmul.f32 %v942, 0.01
    %v975 = vmul.f32 %v943, 0.01
    %v976 = vmul.f32 %v944, 0.01
    %v977 = vmul.f32 %v945, 0.01
    %v978 = vmul.f32 %v946, 0.01
    %v979 = vmul.f32 %v947, 0.01
    %v980 = vmul.f32 %v948, 0.01
    %v981 = vmul.f32 %v949, 0.01
    %v982 = vmul.f32 %v950, 0.01
    %v983 = vmul.f32 %v951, 0.01
    %v984 = vsel %vm952, %v936, %v968
    %v985 = vsel %vm953, %v937, %v969
    %v986 = vsel %vm954, %v938, %v970
    %v987 = vsel %vm955, %v939, %v971
    %v988 = vsel %vm956, %v940, %v972
    %v989 = vsel %vm957, %v941, %v973
    %v990 = vsel %vm958, %v942, %v974
    %v991 = vsel %vm959, %v943, %v975
    %v992 = vsel %vm960, %v944, %v976
    %v993 = vsel %vm961, %v945, %v977
    %v994 = vsel %vm962, %v946, %v978
    %v995 = vsel %vm963, %v947, %v979
    %v996 = vsel %vm964, %v948, %v980
    %v997 = vsel %vm965, %v949, %v981
    %v998 = vsel %vm966, %v950, %v982
    %v999 = vsel %vm967, %v951, %v983
    %v1000 = vld [vmem:[#allocation7] sm:$0xff]
    %v1001 = vld [vmem:[#allocation7 + $0x8] sm:$0xff]
    %v1002 = vld [vmem:[#allocation7 + $0x10] sm:$0xff]
    %v1003 = vld [vmem:[#allocation7 + $0x18] sm:$0xff]
    %v1004 = vld [vmem:[#allocation7 + $0x20] sm:$0xff]
    %v1005 = vld [vmem:[#allocation7 + $0x28] sm:$0xff]
    %v1006 = vld [vmem:[#allocation7 + $0x30] sm:$0xff]
    %v1007 = vld [vmem:[#allocation7 + $0x38] sm:$0xff]
    %v1008 = vld [vmem:[#allocation7 + $0x40] sm:$0xff]
    %v1009 = vld [vmem:[#allocation7 + $0x48] sm:$0xff]
    %v1010 = vld [vmem:[#allocation7 + $0x50] sm:$0xff]
    %v1011 = vld [vmem:[#allocation7 + $0x58] sm:$0xff]
    %v1012 = vld [vmem:[#allocation7 + $0x60] sm:$0xff]
    %v1013 = vld [vmem:[#allocation7 + $0x68] sm:$0xff]
    %v1014 = vld [vmem:[#allocation7 + $0x70] sm:$0xff]
    %v1015 = vld [vmem:[#allocation7 + $0x78] sm:$0xff]
    %v1016 = vld [vmem:[%s6] sm:$0xff]
    %v1017 = vld [vmem:[%s6 + $0x8] sm:$0xff]
    %v1018 = vld [vmem:[%s6 + $0x10] sm:$0xff]
    %v1019 = vld [vmem:[%s6 + $0x18] sm:$0xff]
    %v1020 = vld [vmem:[%s6 + $0x20] sm:$0xff]
    %v1021 = vld [vmem:[%s6 + $0x28] sm:$0xff]
    %v1022 = vld [vmem:[%s6 + $0x30] sm:$0xff]
    %v1023 = vld [vmem:[%s6 + $0x38] sm:$0xff]
    %v1024 = vld [vmem:[%s6 + $0x40] sm:$0xff]
    %v1025 = vld [vmem:[%s6 + $0x48] sm:$0xff]
    %v1026 = vld [vmem:[%s6 + $0x50] sm:$0xff]
    %v1027 = vld [vmem:[%s6 + $0x58] sm:$0xff]
    %v1028 = vld [vmem:[%s6 + $0x60] sm:$0xff]
    %v1029 = vld [vmem:[%s6 + $0x68] sm:$0xff]
    %v1030 = vld [vmem:[%s6 + $0x70] sm:$0xff]
    %v1031 = vld [vmem:[%s6 + $0x78] sm:$0xff]
    %1033 = vset.pattern.permute.xlu0 0
    %1034 = vperm.xlu0 %1033, %v1016
    %v1035 = vpop.permute.xlu0 %1034
    %1038 = vset.pattern.permute.xlu0 0
    %1039 = vperm.xlu0 %1038, %v1017
    %v1040 = vpop.permute.xlu0 %1039
    %1043 = vset.pattern.permute.xlu0 0
    %1044 = vperm.xlu0 %1043, %v1018
    %v1045 = vpop.permute.xlu0 %1044
    %1048 = vset.pattern.permute.xlu0 0
    %1049 = vperm.xlu0 %1048, %v1019
    %v1050 = vpop.permute.xlu0 %1049
    %1053 = vset.pattern.permute.xlu0 0
    %1054 = vperm.xlu0 %1053, %v1020
    %v1055 = vpop.permute.xlu0 %1054
    %1058 = vset.pattern.permute.xlu0 0
    %1059 = vperm.xlu0 %1058, %v1021
    %v1060 = vpop.permute.xlu0 %1059
    %1063 = vset.pattern.permute.xlu0 0
    %1064 = vperm.xlu0 %1063, %v1022
    %v1065 = vpop.permute.xlu0 %1064
    %1068 = vset.pattern.permute.xlu0 0
    %1069 = vperm.xlu0 %1068, %v1023
    %v1070 = vpop.permute.xlu0 %1069
    %1073 = vset.pattern.permute.xlu0 0
    %1074 = vperm.xlu0 %1073, %v1024
    %v1075 = vpop.permute.xlu0 %1074
    %1078 = vset.pattern.permute.xlu0 0
    %1079 = vperm.xlu0 %1078, %v1025
    %v1080 = vpop.permute.xlu0 %1079
    %1083 = vset.pattern.permute.xlu0 0
    %1084 = vperm.xlu0 %1083, %v1026
    %v1085 = vpop.permute.xlu0 %1084
    %1088 = vset.pattern.permute.xlu0 0
    %1089 = vperm.xlu0 %1088, %v1027
    %v1090 = vpop.permute.xlu0 %1089
    %1093 = vset.pattern.permute.xlu0 0
    %1094 = vperm.xlu0 %1093, %v1028
    %v1095 = vpop.permute.xlu0 %1094
    %1098 = vset.pattern.permute.xlu0 0
    %1099 = vperm.xlu0 %1098, %v1029
    %v1100 = vpop.permute.xlu0 %1099
    %1103 = vset.pattern.permute.xlu0 0
    %1104 = vperm.xlu0 %1103, %v1030
    %v1105 = vpop.permute.xlu0 %1104
    %1108 = vset.pattern.permute.xlu0 0
    %1109 = vperm.xlu0 %1108, %v1031
    %v1110 = vpop.permute.xlu0 %1109
    %1112 = vmatprep.subr.mxu0 0.0
    %1113 = vmatpush1.msra.mxu0 %v999
    %1114 = vmatprep.subr.mxu0 0.0
    %1115 = vmatpush1.msra.mxu0 %v998
    %1116 = vmatprep.subr.mxu0 0.0
    %1117 = vmatpush1.msra.mxu0 %v997
    %1118 = vmatprep.subr.mxu0 0.0
    %1119 = vmatpush1.msra.mxu0 %v996
    %1120 = vmatprep.subr.mxu0 0.0
    %1121 = vmatpush1.msra.mxu0 %v995
    %1122 = vmatprep.subr.mxu0 0.0
    %1123 = vmatpush1.msra.mxu0 %v994
    %1124 = vmatprep.subr.mxu0 0.0
    %1125 = vmatpush1.msra.mxu0 %v993
    %1126 = vmatprep.subr.mxu0 0.0
    %1127 = vmatpush1.msra.mxu0 %v992
    %1128 = vmatprep.subr.mxu0 0.0
    %1129 = vmatpush1.msra.mxu0 %v991
    %1130 = vmatprep.subr.mxu0 0.0
    %1131 = vmatpush1.msra.mxu0 %v990
    %1132 = vmatprep.subr.mxu0 0.0
    %1133 = vmatpush1.msra.mxu0 %v989
    %1134 = vmatprep.subr.mxu0 0.0
    %1135 = vmatpush1.msra.mxu0 %v988
    %1136 = vmatprep.subr.mxu0 0.0
    %1137 = vmatpush1.msra.mxu0 %v987
    %1138 = vmatprep.subr.mxu0 0.0
    %1139 = vmatpush1.msra.mxu0 %v986
    %1140 = vmatprep.subr.mxu0 0.0
    %1141 = vmatpush1.msra.mxu0 %v985
    %1142 = vmatprep.subr.mxu0 0.0
    %1143 = vmatpush1.msra.mxu0 %v984
    %1144 = vmatprep.subr.mxu0 0.0
    %1145 = vmatpush2.msra.mxu0 0.0
    %1146 = vmatprep.subr.mxu0 0.0
    %1147 = vmatpush2.msra.mxu0 0.0
    %1148 = vmatprep.subr.mxu0 0.0
    %1149 = vmatpush2.msra.mxu0 0.0
    %1150 = vmatprep.subr.mxu0 0.0
    %1151 = vmatpush2.msra.mxu0 0.0
    %1152 = vmatprep.subr.mxu0 0.0
    %1153 = vmatpush2.msra.mxu0 0.0
    %1154 = vmatprep.subr.mxu0 0.0
    %1155 = vmatpush2.msra.mxu0 0.0
    %1156 = vmatprep.subr.mxu0 0.0
    %1157 = vmatpush2.msra.mxu0 0.0
    %1158 = vmatprep.subr.mxu0 0.0
    %1159 = vmatpush2.msra.mxu0 0.0
    %1160 = vmatprep.subr.mxu0 0.0
    %1161 = vmatpush2.msra.mxu0 0.0
    %1162 = vmatprep.subr.mxu0 0.0
    %1163 = vmatpush2.msra.mxu0 0.0
    %1164 = vmatprep.subr.mxu0 0.0
    %1165 = vmatpush2.msra.mxu0 0.0
    %1166 = vmatprep.subr.mxu0 0.0
    %1167 = vmatpush2.msra.mxu0 0.0
    %1168 = vmatprep.subr.mxu0 0.0
    %1169 = vmatpush2.msra.mxu0 0.0
    %1170 = vmatprep.subr.mxu0 0.0
    %1171 = vmatpush2.msra.mxu0 0.0
    %1172 = vmatprep.subr.mxu0 0.0
    %1173 = vmatpush2.msra.mxu0 0.0
    %1174 = vmatprep.subr.mxu0 0.0
    %1175 = vmatpush2.msra.mxu0 0.0
    %1176 = vmatprep.mubr.f32.mxu0 0.0
    %1177 = vmatmul.mubr.f32.gmra.mxu0 %v1000
    %v1178 = vpop.f32.mrf.mxu0
    %v1179 = vadd.f32 %v1035, %v1178
    %v1180 = vpop.f32.mrf.mxu0
    %1181 = vmatprep.mubr.f32.mxu0 0.0
    %1182 = vmatmul.mubr.f32.gmra.mxu0 %v1001
    %v1183 = vpop.f32.mrf.mxu0
    %v1184 = vadd.f32 %v1040, %v1183
    %v1185 = vpop.f32.mrf.mxu0
    %1186 = vmatprep.mubr.f32.mxu0 0.0
    %1187 = vmatmul.mubr.f32.gmra.mxu0 %v1002
    %v1188 = vpop.f32.mrf.mxu0
    %v1189 = vadd.f32 %v1045, %v1188
    %v1190 = vpop.f32.mrf.mxu0
    %1191 = vmatprep.mubr.f32.mxu0 0.0
    %1192 = vmatmul.mubr.f32.gmra.mxu0 %v1003
    %v1193 = vpop.f32.mrf.mxu0
    %v1194 = vadd.f32 %v1050, %v1193
    %v1195 = vpop.f32.mrf.mxu0
    %1196 = vmatprep.mubr.f32.mxu0 0.0
    %1197 = vmatmul.mubr.f32.gmra.mxu0 %v1004
    %v1198 = vpop.f32.mrf.mxu0
    %v1199 = vadd.f32 %v1055, %v1198
    %v1200 = vpop.f32.mrf.mxu0
    %1201 = vmatprep.mubr.f32.mxu0 0.0
    %1202 = vmatmul.mubr.f32.gmra.mxu0 %v1005
    %v1203 = vpop.f32.mrf.mxu0
    %v1204 = vadd.f32 %v1060, %v1203
    %v1205 = vpop.f32.mrf.mxu0
    %1206 = vmatprep.mubr.f32.mxu0 0.0
    %1207 = vmatmul.mubr.f32.gmra.mxu0 %v1006
    %v1208 = vpop.f32.mrf.mxu0
    %v1209 = vadd.f32 %v1065, %v1208
    %v1210 = vpop.f32.mrf.mxu0
    %1211 = vmatprep.mubr.f32.mxu0 0.0
    %1212 = vmatmul.mubr.f32.gmra.mxu0 %v1007
    %v1213 = vpop.f32.mrf.mxu0
    %v1214 = vadd.f32 %v1070, %v1213
    %v1215 = vpop.f32.mrf.mxu0
    %1216 = vmatprep.mubr.f32.mxu0 0.0
    %1217 = vmatmul.mubr.f32.gmra.mxu0 %v1008
    %v1218 = vpop.f32.mrf.mxu0
    %v1219 = vadd.f32 %v1075, %v1218
    %v1220 = vpop.f32.mrf.mxu0
    %1221 = vmatprep.mubr.f32.mxu0 0.0
    %1222 = vmatmul.mubr.f32.gmra.mxu0 %v1009
    %v1223 = vpop.f32.mrf.mxu0
    %v1224 = vadd.f32 %v1080, %v1223
    %v1225 = vpop.f32.mrf.mxu0
    %1226 = vmatprep.mubr.f32.mxu0 0.0
    %1227 = vmatmul.mubr.f32.gmra.mxu0 %v1010
    %v1228 = vpop.f32.mrf.mxu0
    %v1229 = vadd.f32 %v1085, %v1228
    %v1230 = vpop.f32.mrf.mxu0
    %1231 = vmatprep.mubr.f32.mxu0 0.0
    %1232 = vmatmul.mubr.f32.gmra.mxu0 %v1011
    %v1233 = vpop.f32.mrf.mxu0
    %v1234 = vadd.f32 %v1090, %v1233
    %v1235 = vpop.f32.mrf.mxu0
    %1236 = vmatprep.mubr.f32.mxu0 0.0
    %1237 = vmatmul.mubr.f32.gmra.mxu0 %v1012
    %v1238 = vpop.f32.mrf.mxu0
    %v1239 = vadd.f32 %v1095, %v1238
    %v1240 = vpop.f32.mrf.mxu0
    %1241 = vmatprep.mubr.f32.mxu0 0.0
    %1242 = vmatmul.mubr.f32.gmra.mxu0 %v1013
    %v1243 = vpop.f32.mrf.mxu0
    %v1244 = vadd.f32 %v1100, %v1243
    %v1245 = vpop.f32.mrf.mxu0
    %1246 = vmatprep.mubr.f32.mxu0 0.0
    %1247 = vmatmul.mubr.f32.gmra.mxu0 %v1014
    %v1248 = vpop.f32.mrf.mxu0
    %v1249 = vadd.f32 %v1105, %v1248
    %v1250 = vpop.f32.mrf.mxu0
    %1251 = vmatprep.mubr.f32.mxu0 0.0
    %1252 = vmatmul.mubr.f32.gmra.mxu0 %v1015
    %v1253 = vpop.f32.mrf.mxu0
    %v1254 = vadd.f32 %v1110, %v1253
    %v1255 = vpop.f32.mrf.mxu0
    %1256 = vdwg.mxu0
    %vm1257 = vcmp.gt.f32.partialorder %v1179, 0.0
    %vm1258 = vcmp.gt.f32.partialorder %v1184, 0.0
    %vm1259 = vcmp.gt.f32.partialorder %v1189, 0.0
    %vm1260 = vcmp.gt.f32.partialorder %v1194, 0.0
    %vm1261 = vcmp.gt.f32.partialorder %v1199, 0.0
    %vm1262 = vcmp.gt.f32.partialorder %v1204, 0.0
    %vm1263 = vcmp.gt.f32.partialorder %v1209, 0.0
    %vm1264 = vcmp.gt.f32.partialorder %v1214, 0.0
    %vm1265 = vcmp.gt.f32.partialorder %v1219, 0.0
    %vm1266 = vcmp.gt.f32.partialorder %v1224, 0.0
    %vm1267 = vcmp.gt.f32.partialorder %v1229, 0.0
    %vm1268 = vcmp.gt.f32.partialorder %v1234, 0.0
    %vm1269 = vcmp.gt.f32.partialorder %v1239, 0.0
    %vm1270 = vcmp.gt.f32.partialorder %v1244, 0.0
    %vm1271 = vcmp.gt.f32.partialorder %v1249, 0.0
    %vm1272 = vcmp.gt.f32.partialorder %v1254, 0.0
    %v1273 = vmul.f32 %v1179, 0.01
    %v1274 = vmul.f32 %v1184, 0.01
    %v1275 = vmul.f32 %v1189, 0.01
    %v1276 = vmul.f32 %v1194, 0.01
    %v1277 = vmul.f32 %v1199, 0.01
    %v1278 = vmul.f32 %v1204, 0.01
    %v1279 = vmul.f32 %v1209, 0.01
    %v1280 = vmul.f32 %v1214, 0.01
    %v1281 = vmul.f32 %v1219, 0.01
    %v1282 = vmul.f32 %v1224, 0.01
    %v1283 = vmul.f32 %v1229, 0.01
    %v1284 = vmul.f32 %v1234, 0.01
    %v1285 = vmul.f32 %v1239, 0.01
    %v1286 = vmul.f32 %v1244, 0.01
    %v1287 = vmul.f32 %v1249, 0.01
    %v1288 = vmul.f32 %v1254, 0.01
    %v1289 = vsel %vm1257, %v1179, %v1273
    %v1290 = vsel %vm1258, %v1184, %v1274
    %v1291 = vsel %vm1259, %v1189, %v1275
    %v1292 = vsel %vm1260, %v1194, %v1276
    %v1293 = vsel %vm1261, %v1199, %v1277
    %v1294 = vsel %vm1262, %v1204, %v1278
    %v1295 = vsel %vm1263, %v1209, %v1279
    %v1296 = vsel %vm1264, %v1214, %v1280
    %v1297 = vsel %vm1265, %v1219, %v1281
    %v1298 = vsel %vm1266, %v1224, %v1282
    %v1299 = vsel %vm1267, %v1229, %v1283
    %v1300 = vsel %vm1268, %v1234, %v1284
    %v1301 = vsel %vm1269, %v1239, %v1285
    %v1302 = vsel %vm1270, %v1244, %v1286
    %v1303 = vsel %vm1271, %v1249, %v1287
    %v1304 = vsel %vm1272, %v1254, %v1288
    %v1305 = vld [vmem:[#allocation8] sm:$0xff]
    %v1306 = vld [vmem:[#allocation8 + $0x8] sm:$0xff]
    %v1307 = vld [vmem:[#allocation8 + $0x10] sm:$0xff]
    %v1308 = vld [vmem:[#allocation8 + $0x18] sm:$0xff]
    %v1309 = vld [vmem:[#allocation8 + $0x20] sm:$0xff]
    %v1310 = vld [vmem:[#allocation8 + $0x28] sm:$0xff]
    %v1311 = vld [vmem:[#allocation8 + $0x30] sm:$0xff]
    %v1312 = vld [vmem:[#allocation8 + $0x38] sm:$0xff]
    %v1313 = vld [vmem:[#allocation8 + $0x40] sm:$0xff]
    %v1314 = vld [vmem:[#allocation8 + $0x48] sm:$0xff]
    %v1315 = vld [vmem:[#allocation8 + $0x50] sm:$0xff]
    %v1316 = vld [vmem:[#allocation8 + $0x58] sm:$0xff]
    %v1317 = vld [vmem:[#allocation8 + $0x60] sm:$0xff]
    %v1318 = vld [vmem:[#allocation8 + $0x68] sm:$0xff]
    %v1319 = vld [vmem:[#allocation8 + $0x70] sm:$0xff]
    %v1320 = vld [vmem:[#allocation8 + $0x78] sm:$0xff]
    %v1321 = vld [vmem:[%s8] sm:$0xff]
    %v1322 = vld [vmem:[%s8 + $0x8] sm:$0xff]
    %v1323 = vld [vmem:[%s8 + $0x10] sm:$0xff]
    %v1324 = vld [vmem:[%s8 + $0x18] sm:$0xff]
    %v1325 = vld [vmem:[%s8 + $0x20] sm:$0xff]
    %v1326 = vld [vmem:[%s8 + $0x28] sm:$0xff]
    %v1327 = vld [vmem:[%s8 + $0x30] sm:$0xff]
    %v1328 = vld [vmem:[%s8 + $0x38] sm:$0xff]
    %v1329 = vld [vmem:[%s8 + $0x40] sm:$0xff]
    %v1330 = vld [vmem:[%s8 + $0x48] sm:$0xff]
    %v1331 = vld [vmem:[%s8 + $0x50] sm:$0xff]
    %v1332 = vld [vmem:[%s8 + $0x58] sm:$0xff]
    %v1333 = vld [vmem:[%s8 + $0x60] sm:$0xff]
    %v1334 = vld [vmem:[%s8 + $0x68] sm:$0xff]
    %v1335 = vld [vmem:[%s8 + $0x70] sm:$0xff]
    %v1336 = vld [vmem:[%s8 + $0x78] sm:$0xff]
    %1338 = vset.pattern.permute.xlu0 0
    %1339 = vperm.xlu0 %1338, %v1321
    %v1340 = vpop.permute.xlu0 %1339
    %1343 = vset.pattern.permute.xlu0 0
    %1344 = vperm.xlu0 %1343, %v1322
    %v1345 = vpop.permute.xlu0 %1344
    %1348 = vset.pattern.permute.xlu0 0
    %1349 = vperm.xlu0 %1348, %v1323
    %v1350 = vpop.permute.xlu0 %1349
    %1353 = vset.pattern.permute.xlu0 0
    %1354 = vperm.xlu0 %1353, %v1324
    %v1355 = vpop.permute.xlu0 %1354
    %1358 = vset.pattern.permute.xlu0 0
    %1359 = vperm.xlu0 %1358, %v1325
    %v1360 = vpop.permute.xlu0 %1359
    %1363 = vset.pattern.permute.xlu0 0
    %1364 = vperm.xlu0 %1363, %v1326
    %v1365 = vpop.permute.xlu0 %1364
    %1368 = vset.pattern.permute.xlu0 0
    %1369 = vperm.xlu0 %1368, %v1327
    %v1370 = vpop.permute.xlu0 %1369
    %1373 = vset.pattern.permute.xlu0 0
    %1374 = vperm.xlu0 %1373, %v1328
    %v1375 = vpop.permute.xlu0 %1374
    %1378 = vset.pattern.permute.xlu0 0
    %1379 = vperm.xlu0 %1378, %v1329
    %v1380 = vpop.permute.xlu0 %1379
    %1383 = vset.pattern.permute.xlu0 0
    %1384 = vperm.xlu0 %1383, %v1330
    %v1385 = vpop.permute.xlu0 %1384
    %1388 = vset.pattern.permute.xlu0 0
    %1389 = vperm.xlu0 %1388, %v1331
    %v1390 = vpop.permute.xlu0 %1389
    %1393 = vset.pattern.permute.xlu0 0
    %1394 = vperm.xlu0 %1393, %v1332
    %v1395 = vpop.permute.xlu0 %1394
    %1398 = vset.pattern.permute.xlu0 0
    %1399 = vperm.xlu0 %1398, %v1333
    %v1400 = vpop.permute.xlu0 %1399
    %1403 = vset.pattern.permute.xlu0 0
    %1404 = vperm.xlu0 %1403, %v1334
    %v1405 = vpop.permute.xlu0 %1404
    %1408 = vset.pattern.permute.xlu0 0
    %1409 = vperm.xlu0 %1408, %v1335
    %v1410 = vpop.permute.xlu0 %1409
    %1413 = vset.pattern.permute.xlu0 0
    %1414 = vperm.xlu0 %1413, %v1336
    %v1415 = vpop.permute.xlu0 %1414
    %1417 = vmatprep.subr.mxu0 0.0
    %1418 = vmatpush1.msra.mxu0 %v1304
    %1419 = vmatprep.subr.mxu0 0.0
    %1420 = vmatpush1.msra.mxu0 %v1303
    %1421 = vmatprep.subr.mxu0 0.0
    %1422 = vmatpush1.msra.mxu0 %v1302
    %1423 = vmatprep.subr.mxu0 0.0
    %1424 = vmatpush1.msra.mxu0 %v1301
    %1425 = vmatprep.subr.mxu0 0.0
    %1426 = vmatpush1.msra.mxu0 %v1300
    %1427 = vmatprep.subr.mxu0 0.0
    %1428 = vmatpush1.msra.mxu0 %v1299
    %1429 = vmatprep.subr.mxu0 0.0
    %1430 = vmatpush1.msra.mxu0 %v1298
    %1431 = vmatprep.subr.mxu0 0.0
    %1432 = vmatpush1.msra.mxu0 %v1297
    %1433 = vmatprep.subr.mxu0 0.0
    %1434 = vmatpush1.msra.mxu0 %v1296
    %1435 = vmatprep.subr.mxu0 0.0
    %1436 = vmatpush1.msra.mxu0 %v1295
    %1437 = vmatprep.subr.mxu0 0.0
    %1438 = vmatpush1.msra.mxu0 %v1294
    %1439 = vmatprep.subr.mxu0 0.0
    %1440 = vmatpush1.msra.mxu0 %v1293
    %1441 = vmatprep.subr.mxu0 0.0
    %1442 = vmatpush1.msra.mxu0 %v1292
    %1443 = vmatprep.subr.mxu0 0.0
    %1444 = vmatpush1.msra.mxu0 %v1291
    %1445 = vmatprep.subr.mxu0 0.0
    %1446 = vmatpush1.msra.mxu0 %v1290
    %1447 = vmatprep.subr.mxu0 0.0
    %1448 = vmatpush1.msra.mxu0 %v1289
    %1449 = vmatprep.subr.mxu0 0.0
    %1450 = vmatpush2.msra.mxu0 0.0
    %1451 = vmatprep.subr.mxu0 0.0
    %1452 = vmatpush2.msra.mxu0 0.0
    %1453 = vmatprep.subr.mxu0 0.0
    %1454 = vmatpush2.msra.mxu0 0.0
    %1455 = vmatprep.subr.mxu0 0.0
    %1456 = vmatpush2.msra.mxu0 0.0
    %1457 = vmatprep.subr.mxu0 0.0
    %1458 = vmatpush2.msra.mxu0 0.0
    %1459 = vmatprep.subr.mxu0 0.0
    %1460 = vmatpush2.msra.mxu0 0.0
    %1461 = vmatprep.subr.mxu0 0.0
    %1462 = vmatpush2.msra.mxu0 0.0
    %1463 = vmatprep.subr.mxu0 0.0
    %1464 = vmatpush2.msra.mxu0 0.0
    %1465 = vmatprep.subr.mxu0 0.0
    %1466 = vmatpush2.msra.mxu0 0.0
    %1467 = vmatprep.subr.mxu0 0.0
    %1468 = vmatpush2.msra.mxu0 0.0
    %1469 = vmatprep.subr.mxu0 0.0
    %1470 = vmatpush2.msra.mxu0 0.0
    %1471 = vmatprep.subr.mxu0 0.0
    %1472 = vmatpush2.msra.mxu0 0.0
    %1473 = vmatprep.subr.mxu0 0.0
    %1474 = vmatpush2.msra.mxu0 0.0
    %1475 = vmatprep.subr.mxu0 0.0
    %1476 = vmatpush2.msra.mxu0 0.0
    %1477 = vmatprep.subr.mxu0 0.0
    %1478 = vmatpush2.msra.mxu0 0.0
    %1479 = vmatprep.subr.mxu0 0.0
    %1480 = vmatpush2.msra.mxu0 0.0
    %1481 = vmatprep.mubr.f32.mxu0 0.0
    %1482 = vmatmul.mubr.f32.gmra.mxu0 %v1305
    %v1483 = vpop.f32.mrf.mxu0
    %v1484 = vadd.f32 %v1340, %v1483
    %v1485 = vpop.f32.mrf.mxu0
    %1486 = vmatprep.mubr.f32.mxu0 0.0
    %1487 = vmatmul.mubr.f32.gmra.mxu0 %v1306
    %v1488 = vpop.f32.mrf.mxu0
    %v1489 = vadd.f32 %v1345, %v1488
    %v1490 = vpop.f32.mrf.mxu0
    %1491 = vmatprep.mubr.f32.mxu0 0.0
    %1492 = vmatmul.mubr.f32.gmra.mxu0 %v1307
    %v1493 = vpop.f32.mrf.mxu0
    %v1494 = vadd.f32 %v1350, %v1493
    %v1495 = vpop.f32.mrf.mxu0
    %1496 = vmatprep.mubr.f32.mxu0 0.0
    %1497 = vmatmul.mubr.f32.gmra.mxu0 %v1308
    %v1498 = vpop.f32.mrf.mxu0
    %v1499 = vadd.f32 %v1355, %v1498
    %v1500 = vpop.f32.mrf.mxu0
    %1501 = vmatprep.mubr.f32.mxu0 0.0
    %1502 = vmatmul.mubr.f32.gmra.mxu0 %v1309
    %v1503 = vpop.f32.mrf.mxu0
    %v1504 = vadd.f32 %v1360, %v1503
    %v1505 = vpop.f32.mrf.mxu0
    %1506 = vmatprep.mubr.f32.mxu0 0.0
    %1507 = vmatmul.mubr.f32.gmra.mxu0 %v1310
    %v1508 = vpop.f32.mrf.mxu0
    %v1509 = vadd.f32 %v1365, %v1508
    %v1510 = vpop.f32.mrf.mxu0
    %1511 = vmatprep.mubr.f32.mxu0 0.0
    %1512 = vmatmul.mubr.f32.gmra.mxu0 %v1311
    %v1513 = vpop.f32.mrf.mxu0
    %v1514 = vadd.f32 %v1370, %v1513
    %v1515 = vpop.f32.mrf.mxu0
    %1516 = vmatprep.mubr.f32.mxu0 0.0
    %1517 = vmatmul.mubr.f32.gmra.mxu0 %v1312
    %v1518 = vpop.f32.mrf.mxu0
    %v1519 = vadd.f32 %v1375, %v1518
    %v1520 = vpop.f32.mrf.mxu0
    %1521 = vmatprep.mubr.f32.mxu0 0.0
    %1522 = vmatmul.mubr.f32.gmra.mxu0 %v1313
    %v1523 = vpop.f32.mrf.mxu0
    %v1524 = vadd.f32 %v1380, %v1523
    %v1525 = vpop.f32.mrf.mxu0
    %1526 = vmatprep.mubr.f32.mxu0 0.0
    %1527 = vmatmul.mubr.f32.gmra.mxu0 %v1314
    %v1528 = vpop.f32.mrf.mxu0
    %v1529 = vadd.f32 %v1385, %v1528
    %v1530 = vpop.f32.mrf.mxu0
    %1531 = vmatprep.mubr.f32.mxu0 0.0
    %1532 = vmatmul.mubr.f32.gmra.mxu0 %v1315
    %v1533 = vpop.f32.mrf.mxu0
    %v1534 = vadd.f32 %v1390, %v1533
    %v1535 = vpop.f32.mrf.mxu0
    %1536 = vmatprep.mubr.f32.mxu0 0.0
    %1537 = vmatmul.mubr.f32.gmra.mxu0 %v1316
    %v1538 = vpop.f32.mrf.mxu0
    %v1539 = vadd.f32 %v1395, %v1538
    %v1540 = vpop.f32.mrf.mxu0
    %1541 = vmatprep.mubr.f32.mxu0 0.0
    %1542 = vmatmul.mubr.f32.gmra.mxu0 %v1317
    %v1543 = vpop.f32.mrf.mxu0
    %v1544 = vadd.f32 %v1400, %v1543
    %v1545 = vpop.f32.mrf.mxu0
    %1546 = vmatprep.mubr.f32.mxu0 0.0
    %1547 = vmatmul.mubr.f32.gmra.mxu0 %v1318
    %v1548 = vpop.f32.mrf.mxu0
    %v1549 = vadd.f32 %v1405, %v1548
    %v1550 = vpop.f32.mrf.mxu0
    %1551 = vmatprep.mubr.f32.mxu0 0.0
    %1552 = vmatmul.mubr.f32.gmra.mxu0 %v1319
    %v1553 = vpop.f32.mrf.mxu0
    %v1554 = vadd.f32 %v1410, %v1553
    %v1555 = vpop.f32.mrf.mxu0
    %1556 = vmatprep.mubr.f32.mxu0 0.0
    %1557 = vmatmul.mubr.f32.gmra.mxu0 %v1320
    %v1558 = vpop.f32.mrf.mxu0
    %v1559 = vadd.f32 %v1415, %v1558
    %v1560 = vpop.f32.mrf.mxu0
    %1561 = vdwg.mxu0
    %vm1562 = vcmp.gt.f32.partialorder %v1484, 0.0
    %vm1563 = vcmp.gt.f32.partialorder %v1489, 0.0
    %vm1564 = vcmp.gt.f32.partialorder %v1494, 0.0
    %vm1565 = vcmp.gt.f32.partialorder %v1499, 0.0
    %vm1566 = vcmp.gt.f32.partialorder %v1504, 0.0
    %vm1567 = vcmp.gt.f32.partialorder %v1509, 0.0
    %vm1568 = vcmp.gt.f32.partialorder %v1514, 0.0
    %vm1569 = vcmp.gt.f32.partialorder %v1519, 0.0
    %vm1570 = vcmp.gt.f32.partialorder %v1524, 0.0
    %vm1571 = vcmp.gt.f32.partialorder %v1529, 0.0
    %vm1572 = vcmp.gt.f32.partialorder %v1534, 0.0
    %vm1573 = vcmp.gt.f32.partialorder %v1539, 0.0
    %vm1574 = vcmp.gt.f32.partialorder %v1544, 0.0
    %vm1575 = vcmp.gt.f32.partialorder %v1549, 0.0
    %vm1576 = vcmp.gt.f32.partialorder %v1554, 0.0
    %vm1577 = vcmp.gt.f32.partialorder %v1559, 0.0
    %v1578 = vmul.f32 %v1484, 0.01
    %v1579 = vmul.f32 %v1489, 0.01
    %v1580 = vmul.f32 %v1494, 0.01
    %v1581 = vmul.f32 %v1499, 0.01
    %v1582 = vmul.f32 %v1504, 0.01
    %v1583 = vmul.f32 %v1509, 0.01
    %v1584 = vmul.f32 %v1514, 0.01
    %v1585 = vmul.f32 %v1519, 0.01
    %v1586 = vmul.f32 %v1524, 0.01
    %v1587 = vmul.f32 %v1529, 0.01
    %v1588 = vmul.f32 %v1534, 0.01
    %v1589 = vmul.f32 %v1539, 0.01
    %v1590 = vmul.f32 %v1544, 0.01
    %v1591 = vmul.f32 %v1549, 0.01
    %v1592 = vmul.f32 %v1554, 0.01
    %v1593 = vmul.f32 %v1559, 0.01
    %v1594 = vsel %vm1562, %v1484, %v1578
    %v1595 = vsel %vm1563, %v1489, %v1579
    %v1596 = vsel %vm1564, %v1494, %v1580
    %v1597 = vsel %vm1565, %v1499, %v1581
    %v1598 = vsel %vm1566, %v1504, %v1582
    %v1599 = vsel %vm1567, %v1509, %v1583
    %v1600 = vsel %vm1568, %v1514, %v1584
    %v1601 = vsel %vm1569, %v1519, %v1585
    %v1602 = vsel %vm1570, %v1524, %v1586
    %v1603 = vsel %vm1571, %v1529, %v1587
    %v1604 = vsel %vm1572, %v1534, %v1588
    %v1605 = vsel %vm1573, %v1539, %v1589
    %v1606 = vsel %vm1574, %v1544, %v1590
    %v1607 = vsel %vm1575, %v1549, %v1591
    %v1608 = vsel %vm1576, %v1554, %v1592
    %v1609 = vsel %vm1577, %v1559, %v1593
    %v1610 = vld [vmem:[#allocation10] sm:$0xff]
    %v1611 = vld [vmem:[#allocation10 + $0x8] sm:$0xff]
    %v1612 = vld [vmem:[#allocation10 + $0x10] sm:$0xff]
    %v1613 = vld [vmem:[#allocation10 + $0x18] sm:$0xff]
    %v1614 = vld [vmem:[#allocation10 + $0x20] sm:$0xff]
    %v1615 = vld [vmem:[#allocation10 + $0x28] sm:$0xff]
    %v1616 = vld [vmem:[#allocation10 + $0x30] sm:$0xff]
    %v1617 = vld [vmem:[#allocation10 + $0x38] sm:$0xff]
    %v1618 = vld [vmem:[#allocation10 + $0x40] sm:$0xff]
    %v1619 = vld [vmem:[#allocation10 + $0x48] sm:$0xff]
    %v1620 = vld [vmem:[#allocation10 + $0x50] sm:$0xff]
    %v1621 = vld [vmem:[#allocation10 + $0x58] sm:$0xff]
    %v1622 = vld [vmem:[#allocation10 + $0x60] sm:$0xff]
    %v1623 = vld [vmem:[#allocation10 + $0x68] sm:$0xff]
    %v1624 = vld [vmem:[#allocation10 + $0x70] sm:$0xff]
    %v1625 = vld [vmem:[#allocation10 + $0x78] sm:$0xff]
    %v1626 = vld [vmem:[%s10] sm:$0xff]
    %v1627 = vld [vmem:[%s10 + $0x8] sm:$0xff]
    %v1628 = vld [vmem:[%s10 + $0x10] sm:$0xff]
    %v1629 = vld [vmem:[%s10 + $0x18] sm:$0xff]
    %v1630 = vld [vmem:[%s10 + $0x20] sm:$0xff]
    %v1631 = vld [vmem:[%s10 + $0x28] sm:$0xff]
    %v1632 = vld [vmem:[%s10 + $0x30] sm:$0xff]
    %v1633 = vld [vmem:[%s10 + $0x38] sm:$0xff]
    %v1634 = vld [vmem:[%s10 + $0x40] sm:$0xff]
    %v1635 = vld [vmem:[%s10 + $0x48] sm:$0xff]
    %v1636 = vld [vmem:[%s10 + $0x50] sm:$0xff]
    %v1637 = vld [vmem:[%s10 + $0x58] sm:$0xff]
    %v1638 = vld [vmem:[%s10 + $0x60] sm:$0xff]
    %v1639 = vld [vmem:[%s10 + $0x68] sm:$0xff]
    %v1640 = vld [vmem:[%s10 + $0x70] sm:$0xff]
    %v1641 = vld [vmem:[%s10 + $0x78] sm:$0xff]
    %1643 = vset.pattern.permute.xlu0 0
    %1644 = vperm.xlu0 %1643, %v1626
    %v1645 = vpop.permute.xlu0 %1644
    %1648 = vset.pattern.permute.xlu0 0
    %1649 = vperm.xlu0 %1648, %v1627
    %v1650 = vpop.permute.xlu0 %1649
    %1653 = vset.pattern.permute.xlu0 0
    %1654 = vperm.xlu0 %1653, %v1628
    %v1655 = vpop.permute.xlu0 %1654
    %1658 = vset.pattern.permute.xlu0 0
    %1659 = vperm.xlu0 %1658, %v1629
    %v1660 = vpop.permute.xlu0 %1659
    %1663 = vset.pattern.permute.xlu0 0
    %1664 = vperm.xlu0 %1663, %v1630
    %v1665 = vpop.permute.xlu0 %1664
    %1668 = vset.pattern.permute.xlu0 0
    %1669 = vperm.xlu0 %1668, %v1631
    %v1670 = vpop.permute.xlu0 %1669
    %1673 = vset.pattern.permute.xlu0 0
    %1674 = vperm.xlu0 %1673, %v1632
    %v1675 = vpop.permute.xlu0 %1674
    %1678 = vset.pattern.permute.xlu0 0
    %1679 = vperm.xlu0 %1678, %v1633
    %v1680 = vpop.permute.xlu0 %1679
    %1683 = vset.pattern.permute.xlu0 0
    %1684 = vperm.xlu0 %1683, %v1634
    %v1685 = vpop.permute.xlu0 %1684
    %1688 = vset.pattern.permute.xlu0 0
    %1689 = vperm.xlu0 %1688, %v1635
    %v1690 = vpop.permute.xlu0 %1689
    %1693 = vset.pattern.permute.xlu0 0
    %1694 = vperm.xlu0 %1693, %v1636
    %v1695 = vpop.permute.xlu0 %1694
    %1698 = vset.pattern.permute.xlu0 0
    %1699 = vperm.xlu0 %1698, %v1637
    %v1700 = vpop.permute.xlu0 %1699
    %1703 = vset.pattern.permute.xlu0 0
    %1704 = vperm.xlu0 %1703, %v1638
    %v1705 = vpop.permute.xlu0 %1704
    %1708 = vset.pattern.permute.xlu0 0
    %1709 = vperm.xlu0 %1708, %v1639
    %v1710 = vpop.permute.xlu0 %1709
    %1713 = vset.pattern.permute.xlu0 0
    %1714 = vperm.xlu0 %1713, %v1640
    %v1715 = vpop.permute.xlu0 %1714
    %1718 = vset.pattern.permute.xlu0 0
    %1719 = vperm.xlu0 %1718, %v1641
    %v1720 = vpop.permute.xlu0 %1719
    %1722 = vmatprep.subr.mxu0 0.0
    %1723 = vmatpush1.msra.mxu0 %v1609
    %1724 = vmatprep.subr.mxu0 0.0
    %1725 = vmatpush1.msra.mxu0 %v1608
    %1726 = vmatprep.subr.mxu0 0.0
    %1727 = vmatpush1.msra.mxu0 %v1607
    %1728 = vmatprep.subr.mxu0 0.0
    %1729 = vmatpush1.msra.mxu0 %v1606
    %1730 = vmatprep.subr.mxu0 0.0
    %1731 = vmatpush1.msra.mxu0 %v1605
    %1732 = vmatprep.subr.mxu0 0.0
    %1733 = vmatpush1.msra.mxu0 %v1604
    %1734 = vmatprep.subr.mxu0 0.0
    %1735 = vmatpush1.msra.mxu0 %v1603
    %1736 = vmatprep.subr.mxu0 0.0
    %1737 = vmatpush1.msra.mxu0 %v1602
    %1738 = vmatprep.subr.mxu0 0.0
    %1739 = vmatpush1.msra.mxu0 %v1601
    %1740 = vmatprep.subr.mxu0 0.0
    %1741 = vmatpush1.msra.mxu0 %v1600
    %1742 = vmatprep.subr.mxu0 0.0
    %1743 = vmatpush1.msra.mxu0 %v1599
    %1744 = vmatprep.subr.mxu0 0.0
    %1745 = vmatpush1.msra.mxu0 %v1598
    %1746 = vmatprep.subr.mxu0 0.0
    %1747 = vmatpush1.msra.mxu0 %v1597
    %1748 = vmatprep.subr.mxu0 0.0
    %1749 = vmatpush1.msra.mxu0 %v1596
    %1750 = vmatprep.subr.mxu0 0.0
    %1751 = vmatpush1.msra.mxu0 %v1595
    %1752 = vmatprep.subr.mxu0 0.0
    %1753 = vmatpush1.msra.mxu0 %v1594
    %1754 = vmatprep.subr.mxu0 0.0
    %1755 = vmatpush2.msra.mxu0 0.0
    %1756 = vmatprep.subr.mxu0 0.0
    %1757 = vmatpush2.msra.mxu0 0.0
    %1758 = vmatprep.subr.mxu0 0.0
    %1759 = vmatpush2.msra.mxu0 0.0
    %1760 = vmatprep.subr.mxu0 0.0
    %1761 = vmatpush2.msra.mxu0 0.0
    %1762 = vmatprep.subr.mxu0 0.0
    %1763 = vmatpush2.msra.mxu0 0.0
    %1764 = vmatprep.subr.mxu0 0.0
    %1765 = vmatpush2.msra.mxu0 0.0
    %1766 = vmatprep.subr.mxu0 0.0
    %1767 = vmatpush2.msra.mxu0 0.0
    %1768 = vmatprep.subr.mxu0 0.0
    %1769 = vmatpush2.msra.mxu0 0.0
    %1770 = vmatprep.subr.mxu0 0.0
    %1771 = vmatpush2.msra.mxu0 0.0
    %1772 = vmatprep.subr.mxu0 0.0
    %1773 = vmatpush2.msra.mxu0 0.0
    %1774 = vmatprep.subr.mxu0 0.0
    %1775 = vmatpush2.msra.mxu0 0.0
    %1776 = vmatprep.subr.mxu0 0.0
    %1777 = vmatpush2.msra.mxu0 0.0
    %1778 = vmatprep.subr.mxu0 0.0
    %1779 = vmatpush2.msra.mxu0 0.0
    %1780 = vmatprep.subr.mxu0 0.0
    %1781 = vmatpush2.msra.mxu0 0.0
    %1782 = vmatprep.subr.mxu0 0.0
    %1783 = vmatpush2.msra.mxu0 0.0
    %1784 = vmatprep.subr.mxu0 0.0
    %1785 = vmatpush2.msra.mxu0 0.0
    %1786 = vmatprep.mubr.f32.mxu0 0.0
    %1787 = vmatmul.mubr.f32.gmra.mxu0 %v1610
    %v1788 = vpop.f32.mrf.mxu0
    %v1789 = vadd.f32 %v1645, %v1788
    %v1790 = vpop.f32.mrf.mxu0
    %1791 = vmatprep.mubr.f32.mxu0 0.0
    %1792 = vmatmul.mubr.f32.gmra.mxu0 %v1611
    %v1793 = vpop.f32.mrf.mxu0
    %v1794 = vadd.f32 %v1650, %v1793
    %v1795 = vpop.f32.mrf.mxu0
    %1796 = vmatprep.mubr.f32.mxu0 0.0
    %1797 = vmatmul.mubr.f32.gmra.mxu0 %v1612
    %v1798 = vpop.f32.mrf.mxu0
    %v1799 = vadd.f32 %v1655, %v1798
    %v1800 = vpop.f32.mrf.mxu0
    %1801 = vmatprep.mubr.f32.mxu0 0.0
    %1802 = vmatmul.mubr.f32.gmra.mxu0 %v1613
    %v1803 = vpop.f32.mrf.mxu0
    %v1804 = vadd.f32 %v1660, %v1803
    %v1805 = vpop.f32.mrf.mxu0
    %1806 = vmatprep.mubr.f32.mxu0 0.0
    %1807 = vmatmul.mubr.f32.gmra.mxu0 %v1614
    %v1808 = vpop.f32.mrf.mxu0
    %v1809 = vadd.f32 %v1665, %v1808
    %v1810 = vpop.f32.mrf.mxu0
    %1811 = vmatprep.mubr.f32.mxu0 0.0
    %1812 = vmatmul.mubr.f32.gmra.mxu0 %v1615
    %v1813 = vpop.f32.mrf.mxu0
    %v1814 = vadd.f32 %v1670, %v1813
    %v1815 = vpop.f32.mrf.mxu0
    %1816 = vmatprep.mubr.f32.mxu0 0.0
    %1817 = vmatmul.mubr.f32.gmra.mxu0 %v1616
    %v1818 = vpop.f32.mrf.mxu0
    %v1819 = vadd.f32 %v1675, %v1818
    %v1820 = vpop.f32.mrf.mxu0
    %1821 = vmatprep.mubr.f32.mxu0 0.0
    %1822 = vmatmul.mubr.f32.gmra.mxu0 %v1617
    %v1823 = vpop.f32.mrf.mxu0
    %v1824 = vadd.f32 %v1680, %v1823
    %v1825 = vpop.f32.mrf.mxu0
    %1826 = vmatprep.mubr.f32.mxu0 0.0
    %1827 = vmatmul.mubr.f32.gmra.mxu0 %v1618
    %v1828 = vpop.f32.mrf.mxu0
    %v1829 = vadd.f32 %v1685, %v1828
    %v1830 = vpop.f32.mrf.mxu0
    %1831 = vmatprep.mubr.f32.mxu0 0.0
    %1832 = vmatmul.mubr.f32.gmra.mxu0 %v1619
    %v1833 = vpop.f32.mrf.mxu0
    %v1834 = vadd.f32 %v1690, %v1833
    %v1835 = vpop.f32.mrf.mxu0
    %1836 = vmatprep.mubr.f32.mxu0 0.0
    %1837 = vmatmul.mubr.f32.gmra.mxu0 %v1620
    %v1838 = vpop.f32.mrf.mxu0
    %v1839 = vadd.f32 %v1695, %v1838
    %v1840 = vpop.f32.mrf.mxu0
    %1841 = vmatprep.mubr.f32.mxu0 0.0
    %1842 = vmatmul.mubr.f32.gmra.mxu0 %v1621
    %v1843 = vpop.f32.mrf.mxu0
    %v1844 = vadd.f32 %v1700, %v1843
    %v1845 = vpop.f32.mrf.mxu0
    %1846 = vmatprep.mubr.f32.mxu0 0.0
    %1847 = vmatmul.mubr.f32.gmra.mxu0 %v1622
    %v1848 = vpop.f32.mrf.mxu0
    %v1849 = vadd.f32 %v1705, %v1848
    %v1850 = vpop.f32.mrf.mxu0
    %1851 = vmatprep.mubr.f32.mxu0 0.0
    %1852 = vmatmul.mubr.f32.gmra.mxu0 %v1623
    %v1853 = vpop.f32.mrf.mxu0
    %v1854 = vadd.f32 %v1710, %v1853
    %v1855 = vpop.f32.mrf.mxu0
    %1856 = vmatprep.mubr.f32.mxu0 0.0
    %1857 = vmatmul.mubr.f32.gmra.mxu0 %v1624
    %v1858 = vpop.f32.mrf.mxu0
    %v1859 = vadd.f32 %v1715, %v1858
    %v1860 = vpop.f32.mrf.mxu0
    %1861 = vmatprep.mubr.f32.mxu0 0.0
    %1862 = vmatmul.mubr.f32.gmra.mxu0 %v1625
    %v1863 = vpop.f32.mrf.mxu0
    %v1864 = vadd.f32 %v1720, %v1863
    %v1865 = vpop.f32.mrf.mxu0
    %1866 = vdwg.mxu0
    %vm1867 = vcmp.gt.f32.partialorder %v1789, 0.0
    %vm1868 = vcmp.gt.f32.partialorder %v1794, 0.0
    %vm1869 = vcmp.gt.f32.partialorder %v1799, 0.0
    %vm1870 = vcmp.gt.f32.partialorder %v1804, 0.0
    %vm1871 = vcmp.gt.f32.partialorder %v1809, 0.0
    %vm1872 = vcmp.gt.f32.partialorder %v1814, 0.0
    %vm1873 = vcmp.gt.f32.partialorder %v1819, 0.0
    %vm1874 = vcmp.gt.f32.partialorder %v1824, 0.0
    %vm1875 = vcmp.gt.f32.partialorder %v1829, 0.0
    %vm1876 = vcmp.gt.f32.partialorder %v1834, 0.0
    %vm1877 = vcmp.gt.f32.partialorder %v1839, 0.0
    %vm1878 = vcmp.gt.f32.partialorder %v1844, 0.0
    %vm1879 = vcmp.gt.f32.partialorder %v1849, 0.0
    %vm1880 = vcmp.gt.f32.partialorder %v1854, 0.0
    %vm1881 = vcmp.gt.f32.partialorder %v1859, 0.0
    %vm1882 = vcmp.gt.f32.partialorder %v1864, 0.0
    %v1883 = vmul.f32 %v1789, 0.01
    %v1884 = vmul.f32 %v1794, 0.01
    %v1885 = vmul.f32 %v1799, 0.01
    %v1886 = vmul.f32 %v1804, 0.01
    %v1887 = vmul.f32 %v1809, 0.01
    %v1888 = vmul.f32 %v1814, 0.01
    %v1889 = vmul.f32 %v1819, 0.01
    %v1890 = vmul.f32 %v1824, 0.01
    %v1891 = vmul.f32 %v1829, 0.01
    %v1892 = vmul.f32 %v1834, 0.01
    %v1893 = vmul.f32 %v1839, 0.01
    %v1894 = vmul.f32 %v1844, 0.01
    %v1895 = vmul.f32 %v1849, 0.01
    %v1896 = vmul.f32 %v1854, 0.01
    %v1897 = vmul.f32 %v1859, 0.01
    %v1898 = vmul.f32 %v1864, 0.01
    %v1899 = vsel %vm1867, %v1789, %v1883
    %v1900 = vsel %vm1868, %v1794, %v1884
    %v1901 = vsel %vm1869, %v1799, %v1885
    %v1902 = vsel %vm1870, %v1804, %v1886
    %v1903 = vsel %vm1871, %v1809, %v1887
    %v1904 = vsel %vm1872, %v1814, %v1888
    %v1905 = vsel %vm1873, %v1819, %v1889
    %v1906 = vsel %vm1874, %v1824, %v1890
    %v1907 = vsel %vm1875, %v1829, %v1891
    %v1908 = vsel %vm1876, %v1834, %v1892
    %v1909 = vsel %vm1877, %v1839, %v1893
    %v1910 = vsel %vm1878, %v1844, %v1894
    %v1911 = vsel %vm1879, %v1849, %v1895
    %v1912 = vsel %vm1880, %v1854, %v1896
    %v1913 = vsel %vm1881, %v1859, %v1897
    %v1914 = vsel %vm1882, %v1864, %v1898
    %v1915 = vld [vmem:[#allocation11] sm:$0xff]
    %v1916 = vld [vmem:[#allocation11 + $0x8] sm:$0xff]
    %v1917 = vld [vmem:[#allocation11 + $0x10] sm:$0xff]
    %v1918 = vld [vmem:[#allocation11 + $0x18] sm:$0xff]
    %v1919 = vld [vmem:[#allocation11 + $0x20] sm:$0xff]
    %v1920 = vld [vmem:[#allocation11 + $0x28] sm:$0xff]
    %v1921 = vld [vmem:[#allocation11 + $0x30] sm:$0xff]
    %v1922 = vld [vmem:[#allocation11 + $0x38] sm:$0xff]
    %v1923 = vld [vmem:[#allocation11 + $0x40] sm:$0xff]
    %v1924 = vld [vmem:[#allocation11 + $0x48] sm:$0xff]
    %v1925 = vld [vmem:[#allocation11 + $0x50] sm:$0xff]
    %v1926 = vld [vmem:[#allocation11 + $0x58] sm:$0xff]
    %v1927 = vld [vmem:[#allocation11 + $0x60] sm:$0xff]
    %v1928 = vld [vmem:[#allocation11 + $0x68] sm:$0xff]
    %v1929 = vld [vmem:[#allocation11 + $0x70] sm:$0xff]
    %v1930 = vld [vmem:[#allocation11 + $0x78] sm:$0xff]
    %v1931 = vld [vmem:[%s12] sm:$0xff]
    %v1932 = vld [vmem:[%s12 + $0x8] sm:$0xff]
    %v1933 = vld [vmem:[%s12 + $0x10] sm:$0xff]
    %v1934 = vld [vmem:[%s12 + $0x18] sm:$0xff]
    %v1935 = vld [vmem:[%s12 + $0x20] sm:$0xff]
    %v1936 = vld [vmem:[%s12 + $0x28] sm:$0xff]
    %v1937 = vld [vmem:[%s12 + $0x30] sm:$0xff]
    %v1938 = vld [vmem:[%s12 + $0x38] sm:$0xff]
    %v1939 = vld [vmem:[%s12 + $0x40] sm:$0xff]
    %v1940 = vld [vmem:[%s12 + $0x48] sm:$0xff]
    %v1941 = vld [vmem:[%s12 + $0x50] sm:$0xff]
    %v1942 = vld [vmem:[%s12 + $0x58] sm:$0xff]
    %v1943 = vld [vmem:[%s12 + $0x60] sm:$0xff]
    %v1944 = vld [vmem:[%s12 + $0x68] sm:$0xff]
    %v1945 = vld [vmem:[%s12 + $0x70] sm:$0xff]
    %v1946 = vld [vmem:[%s12 + $0x78] sm:$0xff]
    %1948 = vset.pattern.permute.xlu0 0
    %1949 = vperm.xlu0 %1948, %v1931
    %v1950 = vpop.permute.xlu0 %1949
    %1953 = vset.pattern.permute.xlu0 0
    %1954 = vperm.xlu0 %1953, %v1932
    %v1955 = vpop.permute.xlu0 %1954
    %1958 = vset.pattern.permute.xlu0 0
    %1959 = vperm.xlu0 %1958, %v1933
    %v1960 = vpop.permute.xlu0 %1959
    %1963 = vset.pattern.permute.xlu0 0
    %1964 = vperm.xlu0 %1963, %v1934
    %v1965 = vpop.permute.xlu0 %1964
    %1968 = vset.pattern.permute.xlu0 0
    %1969 = vperm.xlu0 %1968, %v1935
    %v1970 = vpop.permute.xlu0 %1969
    %1973 = vset.pattern.permute.xlu0 0
    %1974 = vperm.xlu0 %1973, %v1936
    %v1975 = vpop.permute.xlu0 %1974
    %1978 = vset.pattern.permute.xlu0 0
    %1979 = vperm.xlu0 %1978, %v1937
    %v1980 = vpop.permute.xlu0 %1979
    %1983 = vset.pattern.permute.xlu0 0
    %1984 = vperm.xlu0 %1983, %v1938
    %v1985 = vpop.permute.xlu0 %1984
    %1988 = vset.pattern.permute.xlu0 0
    %1989 = vperm.xlu0 %1988, %v1939
    %v1990 = vpop.permute.xlu0 %1989
    %1993 = vset.pattern.permute.xlu0 0
    %1994 = vperm.xlu0 %1993, %v1940
    %v1995 = vpop.permute.xlu0 %1994
    %1998 = vset.pattern.permute.xlu0 0
    %1999 = vperm.xlu0 %1998, %v1941
    %v2000 = vpop.permute.xlu0 %1999
    %2003 = vset.pattern.permute.xlu0 0
    %2004 = vperm.xlu0 %2003, %v1942
    %v2005 = vpop.permute.xlu0 %2004
    %2008 = vset.pattern.permute.xlu0 0
    %2009 = vperm.xlu0 %2008, %v1943
    %v2010 = vpop.permute.xlu0 %2009
    %2013 = vset.pattern.permute.xlu0 0
    %2014 = vperm.xlu0 %2013, %v1944
    %v2015 = vpop.permute.xlu0 %2014
    %2018 = vset.pattern.permute.xlu0 0
    %2019 = vperm.xlu0 %2018, %v1945
    %v2020 = vpop.permute.xlu0 %2019
    %2023 = vset.pattern.permute.xlu0 0
    %2024 = vperm.xlu0 %2023, %v1946
    %v2025 = vpop.permute.xlu0 %2024
    %2027 = vmatprep.subr.mxu0 0.0
    %2028 = vmatpush1.msra.mxu0 %v1914
    %2029 = vmatprep.subr.mxu0 0.0
    %2030 = vmatpush1.msra.mxu0 %v1913
    %2031 = vmatprep.subr.mxu0 0.0
    %2032 = vmatpush1.msra.mxu0 %v1912
    %2033 = vmatprep.subr.mxu0 0.0
    %2034 = vmatpush1.msra.mxu0 %v1911
    %2035 = vmatprep.subr.mxu0 0.0
    %2036 = vmatpush1.msra.mxu0 %v1910
    %2037 = vmatprep.subr.mxu0 0.0
    %2038 = vmatpush1.msra.mxu0 %v1909
    %2039 = vmatprep.subr.mxu0 0.0
    %2040 = vmatpush1.msra.mxu0 %v1908
    %2041 = vmatprep.subr.mxu0 0.0
    %2042 = vmatpush1.msra.mxu0 %v1907
    %2043 = vmatprep.subr.mxu0 0.0
    %2044 = vmatpush1.msra.mxu0 %v1906
    %2045 = vmatprep.subr.mxu0 0.0
    %2046 = vmatpush1.msra.mxu0 %v1905
    %2047 = vmatprep.subr.mxu0 0.0
    %2048 = vmatpush1.msra.mxu0 %v1904
    %2049 = vmatprep.subr.mxu0 0.0
    %2050 = vmatpush1.msra.mxu0 %v1903
    %2051 = vmatprep.subr.mxu0 0.0
    %2052 = vmatpush1.msra.mxu0 %v1902
    %2053 = vmatprep.subr.mxu0 0.0
    %2054 = vmatpush1.msra.mxu0 %v1901
    %2055 = vmatprep.subr.mxu0 0.0
    %2056 = vmatpush1.msra.mxu0 %v1900
    %2057 = vmatprep.subr.mxu0 0.0
    %2058 = vmatpush1.msra.mxu0 %v1899
    %2059 = vmatprep.subr.mxu0 0.0
    %2060 = vmatpush2.msra.mxu0 0.0
    %2061 = vmatprep.subr.mxu0 0.0
    %2062 = vmatpush2.msra.mxu0 0.0
    %2063 = vmatprep.subr.mxu0 0.0
    %2064 = vmatpush2.msra.mxu0 0.0
    %2065 = vmatprep.subr.mxu0 0.0
    %2066 = vmatpush2.msra.mxu0 0.0
    %2067 = vmatprep.subr.mxu0 0.0
    %2068 = vmatpush2.msra.mxu0 0.0
    %2069 = vmatprep.subr.mxu0 0.0
    %2070 = vmatpush2.msra.mxu0 0.0
    %2071 = vmatprep.subr.mxu0 0.0
    %2072 = vmatpush2.msra.mxu0 0.0
    %2073 = vmatprep.subr.mxu0 0.0
    %2074 = vmatpush2.msra.mxu0 0.0
    %2075 = vmatprep.subr.mxu0 0.0
    %2076 = vmatpush2.msra.mxu0 0.0
    %2077 = vmatprep.subr.mxu0 0.0
    %2078 = vmatpush2.msra.mxu0 0.0
    %2079 = vmatprep.subr.mxu0 0.0
    %2080 = vmatpush2.msra.mxu0 0.0
    %2081 = vmatprep.subr.mxu0 0.0
    %2082 = vmatpush2.msra.mxu0 0.0
    %2083 = vmatprep.subr.mxu0 0.0
    %2084 = vmatpush2.msra.mxu0 0.0
    %2085 = vmatprep.subr.mxu0 0.0
    %2086 = vmatpush2.msra.mxu0 0.0
    %2087 = vmatprep.subr.mxu0 0.0
    %2088 = vmatpush2.msra.mxu0 0.0
    %2089 = vmatprep.subr.mxu0 0.0
    %2090 = vmatpush2.msra.mxu0 0.0
    %2091 = vmatprep.mubr.f32.mxu0 0.0
    %2092 = vmatmul.mubr.f32.gmra.mxu0 %v1915
    %v2093 = vpop.f32.mrf.mxu0
    %v2094 = vadd.f32 %v1950, %v2093
    %v2095 = vpop.f32.mrf.mxu0
    %2096 = vmatprep.mubr.f32.mxu0 0.0
    %2097 = vmatmul.mubr.f32.gmra.mxu0 %v1916
    %v2098 = vpop.f32.mrf.mxu0
    %v2099 = vadd.f32 %v1955, %v2098
    %v2100 = vpop.f32.mrf.mxu0
    %2101 = vmatprep.mubr.f32.mxu0 0.0
    %2102 = vmatmul.mubr.f32.gmra.mxu0 %v1917
    %v2103 = vpop.f32.mrf.mxu0
    %v2104 = vadd.f32 %v1960, %v2103
    %v2105 = vpop.f32.mrf.mxu0
    %2106 = vmatprep.mubr.f32.mxu0 0.0
    %2107 = vmatmul.mubr.f32.gmra.mxu0 %v1918
    %v2108 = vpop.f32.mrf.mxu0
    %v2109 = vadd.f32 %v1965, %v2108
    %v2110 = vpop.f32.mrf.mxu0
    %2111 = vmatprep.mubr.f32.mxu0 0.0
    %2112 = vmatmul.mubr.f32.gmra.mxu0 %v1919
    %v2113 = vpop.f32.mrf.mxu0
    %v2114 = vadd.f32 %v1970, %v2113
    %v2115 = vpop.f32.mrf.mxu0
    %2116 = vmatprep.mubr.f32.mxu0 0.0
    %2117 = vmatmul.mubr.f32.gmra.mxu0 %v1920
    %v2118 = vpop.f32.mrf.mxu0
    %v2119 = vadd.f32 %v1975, %v2118
    %v2120 = vpop.f32.mrf.mxu0
    %2121 = vmatprep.mubr.f32.mxu0 0.0
    %2122 = vmatmul.mubr.f32.gmra.mxu0 %v1921
    %v2123 = vpop.f32.mrf.mxu0
    %v2124 = vadd.f32 %v1980, %v2123
    %v2125 = vpop.f32.mrf.mxu0
    %2126 = vmatprep.mubr.f32.mxu0 0.0
    %2127 = vmatmul.mubr.f32.gmra.mxu0 %v1922
    %v2128 = vpop.f32.mrf.mxu0
    %v2129 = vadd.f32 %v1985, %v2128
    %v2130 = vpop.f32.mrf.mxu0
    %2131 = vmatprep.mubr.f32.mxu0 0.0
    %2132 = vmatmul.mubr.f32.gmra.mxu0 %v1923
    %v2133 = vpop.f32.mrf.mxu0
    %v2134 = vadd.f32 %v1990, %v2133
    %v2135 = vpop.f32.mrf.mxu0
    %2136 = vmatprep.mubr.f32.mxu0 0.0
    %2137 = vmatmul.mubr.f32.gmra.mxu0 %v1924
    %v2138 = vpop.f32.mrf.mxu0
    %v2139 = vadd.f32 %v1995, %v2138
    %v2140 = vpop.f32.mrf.mxu0
    %2141 = vmatprep.mubr.f32.mxu0 0.0
    %2142 = vmatmul.mubr.f32.gmra.mxu0 %v1925
    %v2143 = vpop.f32.mrf.mxu0
    %v2144 = vadd.f32 %v2000, %v2143
    %v2145 = vpop.f32.mrf.mxu0
    %2146 = vmatprep.mubr.f32.mxu0 0.0
    %2147 = vmatmul.mubr.f32.gmra.mxu0 %v1926
    %v2148 = vpop.f32.mrf.mxu0
    %v2149 = vadd.f32 %v2005, %v2148
    %v2150 = vpop.f32.mrf.mxu0
    %2151 = vmatprep.mubr.f32.mxu0 0.0
    %2152 = vmatmul.mubr.f32.gmra.mxu0 %v1927
    %v2153 = vpop.f32.mrf.mxu0
    %v2154 = vadd.f32 %v2010, %v2153
    %v2155 = vpop.f32.mrf.mxu0
    %2156 = vmatprep.mubr.f32.mxu0 0.0
    %2157 = vmatmul.mubr.f32.gmra.mxu0 %v1928
    %v2158 = vpop.f32.mrf.mxu0
    %v2159 = vadd.f32 %v2015, %v2158
    %v2160 = vpop.f32.mrf.mxu0
    %2161 = vmatprep.mubr.f32.mxu0 0.0
    %2162 = vmatmul.mubr.f32.gmra.mxu0 %v1929
    %v2163 = vpop.f32.mrf.mxu0
    %v2164 = vadd.f32 %v2020, %v2163
    %v2165 = vpop.f32.mrf.mxu0
    %2166 = vmatprep.mubr.f32.mxu0 0.0
    %2167 = vmatmul.mubr.f32.gmra.mxu0 %v1930
    %v2168 = vpop.f32.mrf.mxu0
    %v2169 = vadd.f32 %v2025, %v2168
    %v2170 = vpop.f32.mrf.mxu0
    %2171 = vdwg.mxu0
    %2172 = vst.msk [vmem:[%s13] sm:$0xff] %vm352, %v2094
    %2173 = vst.msk [vmem:[%s13 + $0x8] sm:$0xff] %vm352, %v2099
    %2174 = vst.msk [vmem:[%s13 + $0x10] sm:$0xff] %vm352, %v2104
    %2175 = vst.msk [vmem:[%s13 + $0x18] sm:$0xff] %vm352, %v2109
    %2176 = vst.msk [vmem:[%s13 + $0x20] sm:$0xff] %vm352, %v2114
    %2177 = vst.msk [vmem:[%s13 + $0x28] sm:$0xff] %vm352, %v2119
    %2178 = vst.msk [vmem:[%s13 + $0x30] sm:$0xff] %vm352, %v2124
    %2179 = vst.msk [vmem:[%s13 + $0x38] sm:$0xff] %vm352, %v2129
    %2180 = vst.msk [vmem:[%s13 + $0x40] sm:$0xff] %vm352, %v2134
    %2181 = vst.msk [vmem:[%s13 + $0x48] sm:$0xff] %vm352, %v2139
    %2182 = vst.msk [vmem:[%s13 + $0x50] sm:$0xff] %vm352, %v2144
    %2183 = vst.msk [vmem:[%s13 + $0x58] sm:$0xff] %vm352, %v2149
    %2184 = vst.msk [vmem:[%s13 + $0x60] sm:$0xff] %vm352, %v2154
    %2185 = vst.msk [vmem:[%s13 + $0x68] sm:$0xff] %vm352, %v2159
    %2186 = vst.msk [vmem:[%s13 + $0x70] sm:$0xff] %vm352, %v2164
    %2187 = vst.msk [vmem:[%s13 + $0x78] sm:$0xff] %vm352, %v2169
    // Predicated region
    $region85: #{predict_net_forward.1} parent=1 // pred_check
      _
    $region86: #{predict_net_forward.1} parent=1 // pred_check_branch
      %2189 = sbr.rel (0) target = $region88
    $region87: #{predict_net_forward.1} parent=1 // pred_region
      _
    $region88: #{predict_net_forward.1} parent=1 // pred_fallthru
      _
    // Predicated region
    $region89: #{predict_net_forward.1} parent=1 // pred_check
      _
    $region90: #{predict_net_forward.1} parent=1 // pred_check_branch
      %2191 = sbr.rel (0) target = $region92
    $region91: #{predict_net_forward.1} parent=1 // pred_region
      _
    $region92: #{predict_net_forward.1} parent=1 // pred_fallthru
      _
    %2192 = vsyncpa [#allocation4], 1
    %2193 = vsyncpa [#allocation6], 1
    %2194 = vsyncpa [#allocation9], 1
    %2195 = vsyncpa [#allocation12], 1

</llo_original>
